<compile_context>
chip_gen: v5e
topology: v5e:2x2
jax: 0.10.0
libtpu: 0.0.40
codegen_flags: <defaults>
</compile_context>

<pallas_src>
import functools
import math

import jax
import jax.numpy as jnp
from jax.experimental import pallas as pl
from jax.experimental.pallas import tpu as pltpu


# ----------------------------------------------------------------------------
# Shared helpers (traced inside kernels)
# ----------------------------------------------------------------------------
def _lane_chunk_reduce(val, chunk, n_chunks, op):
    """Reduce across `n_chunks` lane-chunks of width `chunk` via cyclic XLU rolls.

    Every chunk of the result holds the full reduction. Tree-structured when
    n_chunks is a power of two (log2(n) rolls), linear chain otherwise.
    """
    if n_chunks & (n_chunks - 1) == 0:
        shift = chunk
        while shift < chunk * n_chunks:
            val = op(val, pltpu.roll(val, shift, 1))
            shift *= 2
        return val
    acc = val
    for i in range(1, n_chunks):
        acc = op(acc, pltpu.roll(val, i * chunk, 1))
    return acc


def _vsn_grn(x, wbd, vb, w1, b1, w2, b2, wg, bg, *, hidden_size, num_vars):
    """VSN (block-diagonal matmul + lane-roll softmax) followed by the GRN."""
    H, V = hidden_size, num_vars
    # VSN: one (rows, V*H) @ (V*H, V*H) matmul replaces 4 tiny per-variable matmuls.
    t = jnp.dot(x, wbd, preferred_element_type=jnp.float32) + vb          # (rows, V*H)
    m = _lane_chunk_reduce(t, H, V, jnp.maximum)
    e = jnp.exp(t - m)
    den = _lane_chunk_reduce(e, H, V, jnp.add)
    num = _lane_chunk_reduce(e * x, H, V, jnp.add)
    # Reciprocal deferred until after the [:, :H] slice (den is chunk-invariant).
    selected = num[:, :H] * pl.reciprocal(den[:, :H], approx=True)        # (rows, H)

    # GRN
    h1 = jnp.maximum(
        jnp.dot(selected, w1, preferred_element_type=jnp.float32) + b1, 0.0)
    out = jnp.dot(h1, w2, preferred_element_type=jnp.float32) + b2
    gate = jax.nn.sigmoid(
        jnp.dot(out, wg, preferred_element_type=jnp.float32) + bg)
    return gate * out + (1.0 - gate) * selected                           # (rows, H)


# ----------------------------------------------------------------------------
# Kernel A: row-wise part (VSN -> GRN -> fused QKV projection), gridded over L.
# ----------------------------------------------------------------------------
def rowwise_kernel(x_ref, wbd_ref, vb_ref,
                   w1_ref, b1_ref, w2_ref, b2_ref, wg_ref, bg_ref,
                   wqkv_ref, bqkv_ref, qkv_ref, *, hidden_size, num_vars):
    processed = _vsn_grn(
        x_ref[...], wbd_ref[...], vb_ref[...],
        w1_ref[...], b1_ref[...], w2_ref[...], b2_ref[...],
        wg_ref[...], bg_ref[...],
        hidden_size=hidden_size, num_vars=num_vars)
    # Single fused QKV matmul -> one lane-dense (TL, QKV_PAD) store.
    qkv_ref[...] = (jnp.dot(processed, wqkv_ref[...],
                            preferred_element_type=jnp.float32)
                    + bqkv_ref[...]).astype(qkv_ref.dtype)


# ----------------------------------------------------------------------------
# Kernel B: flash-style multi-head self-attention + output + quantile projection.
# Grid: (L//TQ, L//TK) with kv innermost; online-softmax scratch carried across kv.
# ----------------------------------------------------------------------------
def attn_kernel(qkv_q_ref, qkv_kv_ref, wo_ref, bo_ref, qpw_ref, qpb_ref,
                o_ref, qh_sc, m_sc, l_sc, acc_sc, *, hidden_size, num_heads):
    H = hidden_size
    nh = num_heads
    hd = H // nh
    ki = pl.program_id(1)
    TQ = qkv_q_ref.shape[0]
    TK = qkv_kv_ref.shape[0]
    mxu_dtype = qh_sc.dtype

    @pl.when(ki == 0)
    def _():
        m_sc[...] = jnp.full_like(m_sc, -jnp.inf)
        l_sc[...] = jnp.zeros_like(l_sc)
        acc_sc[...] = jnp.zeros_like(acc_sc)
        # Hoisted head-split of q: computed once per q-tile, reused across all kv steps.
        q = qkv_q_ref[:, :H]                                             # (TQ, H)
        qh_sc[...] = jnp.transpose(q.reshape(TQ, nh, hd), (1, 0, 2)).astype(mxu_dtype)

    kv = qkv_kv_ref[...]                                                 # (TK, QKV_PAD)
    kh = jnp.transpose(kv[:, H:2 * H].reshape(TK, nh, hd), (1, 0, 2)).astype(mxu_dtype)
    vh = jnp.transpose(kv[:, 2 * H:3 * H].reshape(TK, nh, hd), (1, 0, 2)).astype(mxu_dtype)

    s = jnp.einsum('hqd,hkd->hqk', qh_sc[...], kh,
                   preferred_element_type=jnp.float32)                   # (nh, TQ, TK)
    m_prev = m_sc[...]                                                   # (nh, TQ, 1)
    m_next = jnp.maximum(m_prev, s.max(axis=-1, keepdims=True))
    alpha = jnp.exp(m_prev - m_next)                                     # (nh, TQ, 1)
    p = jnp.exp(s - m_next)                                              # (nh, TQ, TK)
    l_sc[...] = alpha * l_sc[...] + p.sum(axis=-1, keepdims=True)
    m_sc[...] = m_next

    # q-major PV einsum -> (TQ, nh, hd); accumulator kept contiguous as (TQ, H).
    pv = jnp.einsum('hqk,hkd->qhd', p.astype(mxu_dtype), vh,
                    preferred_element_type=jnp.float32)                  # (TQ, nh, hd)
    alpha_q = jnp.transpose(alpha, (1, 0, 2))                            # (TQ, nh, 1)
    acc3 = acc_sc[...].reshape(TQ, nh, hd)
    acc_sc[...] = (alpha_q * acc3 + pv).reshape(TQ, H)

    @pl.when(ki == pl.num_programs(1) - 1)
    def _():
        # Exact divide in the (once-per-q-tile) epilogue; no epilogue transpose needed.
        inv_l = jnp.transpose(1.0 / l_sc[...], (1, 0, 2))                # (TQ, nh, 1)
        attn2d = (acc_sc[...].reshape(TQ, nh, hd) * inv_l).reshape(TQ, H)
        out = jnp.dot(attn2d, wo_ref[...], preferred_element_type=jnp.float32) + bo_ref[...]
        o_ref[...] = (jnp.dot(out, qpw_ref[...],                         # (TQ, 128) lane-dense
                              preferred_element_type=jnp.float32)
                      + qpb_ref[...]).astype(o_ref.dtype)


# ----------------------------------------------------------------------------
# Fused single-call kernel for small L (L fits one tile): VSN -> GRN -> attention
# with K/V fully VMEM-resident -> output + quantile projection. One launch, no
# qkv HBM round trip.
# ----------------------------------------------------------------------------
def fused_kernel(x_ref, wbd_ref, vb_ref,
                 w1_ref, b1_ref, w2_ref, b2_ref, wg_ref, bg_ref,
                 wqkv_ref, bqkv_ref, wo_ref, bo_ref, qpw_ref, qpb_ref,
                 o_ref, *, hidden_size, num_vars, num_heads, mxu_dtype):
    H = hidden_size
    nh = num_heads
    hd = H // nh
    L = x_ref.shape[0]

    processed = _vsn_grn(
        x_ref[...], wbd_ref[...], vb_ref[...],
        w1_ref[...], b1_ref[...], w2_ref[...], b2_ref[...],
        wg_ref[...], bg_ref[...],
        hidden_size=hidden_size, num_vars=num_vars)

    qkv = jnp.dot(processed, wqkv_ref[...], preferred_element_type=jnp.float32) + bqkv_ref[...]
    qh = jnp.transpose(qkv[:, :H].reshape(L, nh, hd), (1, 0, 2)).astype(mxu_dtype)
    kh = jnp.transpose(qkv[:, H:2 * H].reshape(L, nh, hd), (1, 0, 2)).astype(mxu_dtype)
    vh = jnp.transpose(qkv[:, 2 * H:3 * H].reshape(L, nh, hd), (1, 0, 2)).astype(mxu_dtype)

    s = jnp.einsum('hqd,hkd->hqk', qh, kh, preferred_element_type=jnp.float32)
    m = s.max(axis=-1, keepdims=True)
    p = jnp.exp(s - m)
    l = p.sum(axis=-1, keepdims=True)                                    # (nh, L, 1)
    pv = jnp.einsum('hqk,hkd->qhd', p.astype(mxu_dtype), vh,
                    preferred_element_type=jnp.float32)                  # (L, nh, hd)
    inv_l = jnp.transpose(1.0 / l, (1, 0, 2))                            # exact divide
    attn2d = (pv * inv_l).reshape(L, H)

    out = jnp.dot(attn2d, wo_ref[...], preferred_element_type=jnp.float32) + bo_ref[...]
    o_ref[...] = (jnp.dot(out, qpw_ref[...], preferred_element_type=jnp.float32)
                  + qpb_ref[...]).astype(o_ref.dtype)


# ----------------------------------------------------------------------------
# Parameters (PyTorch (out_features, in_features) layout, synthetic values).
# ----------------------------------------------------------------------------
def init_params(key, num_features, hidden_size, num_vars=4):
    H, F = hidden_size, num_features
    ks = jax.random.split(key, 14)

    def w(k, shape, scale=0.1):
        return scale * jax.random.normal(k, shape, dtype=jnp.float32)

    return dict(
        vsn_w=w(ks[0], (num_vars, H, F)), vsn_b=w(ks[1], (num_vars, H)),
        g_w1=w(ks[2], (2 * H, H)),  g_b1=w(ks[3], (2 * H,)),
        g_w2=w(ks[4], (H, 2 * H)),  g_b2=w(ks[5], (H,)),
        g_wg=w(ks[6], (H, H)),      g_bg=w(ks[7], (H,)),
        a_wqkv=w(ks[8], (3 * H, H)), a_bqkv=w(ks[9], (3 * H,)),
        a_wo=w(ks[10], (H, H)),     a_bo=w(ks[11], (H,)),
        qp_w=w(ks[12], (3, H)),     qp_b=w(ks[13], (3,)),
    )


# ----------------------------------------------------------------------------
# Wrapper
# ----------------------------------------------------------------------------
def _round_up(x, m):
    return ((x + m - 1) // m) * m


def _pick_row_tile(L, cap):
    """Largest multiple-of-8 divisor of L that is <= cap (falls back to L itself)."""
    if L <= cap:
        return L
    t = min(cap, L)
    t -= t % 8
    while t >= 8:
        if L % t == 0:
            return t
        t -= 8
    return L


def _default_vmem_limit_bytes():
    try:
        kind = jax.devices()[0].device_kind.lower()
    except Exception:
        kind = ""
    if "v7" in kind:
        return 40 * 1024 * 1024   # v7x: 64 MiB physical/TC -> leave compiler headroom
    return 64 * 1024 * 1024       # v5e/v6e: 128 MiB physical


def tft_forward(x, params, hidden_size, num_heads, *,
                max_q_tile=256, max_kv_tile=128, fuse_max_rows=256,
                use_bf16_attention=False, vmem_limit_bytes=None):
    """x: (L, num_features, 4) float32 — same convention as the PyTorch module."""
    H = hidden_size
    L, F, V = x.shape
    assert F == H, "original module's VSN broadcast requires num_features == hidden_size"
    assert H % num_heads == 0
    nh = num_heads
    hd = H // nh
    QKV_PAD = max(128, _round_up(3 * H, 128))   # lane-dense fused-QKV width
    OUT_PAD = 128                               # lane-dense padded quantile output
    mxu_dtype = jnp.bfloat16 if use_bf16_attention else jnp.float32
    if vmem_limit_bytes is None:
        vmem_limit_bytes = _default_vmem_limit_bytes()

    xf = x.astype(jnp.float32)
    # (L, F, V) -> (L, V*F); lane index = v*F + f
    x_cat = jnp.transpose(xf, (0, 2, 1)).reshape(L, V * F)
    # Block-diagonal VSN weight: one (V*F, V*H) matmul replaces 4 tiny ones.
    wbd = jax.scipy.linalg.block_diag(*[params["vsn_w"][i].T for i in range(V)])
    bcat = params["vsn_b"].reshape(1, V * H)

    # Fused QKV weight (1/sqrt(head_dim) folded into the q columns), zero-padded to 128.
    scale = 1.0 / math.sqrt(hd)
    wqkv = jnp.zeros((H, QKV_PAD), jnp.float32)
    wqkv = (wqkv.at[:, :H].set(params["a_wqkv"][:H].T * scale)
                 .at[:, H:2 * H].set(params["a_wqkv"][H:2 * H].T)
                 .at[:, 2 * H:3 * H].set(params["a_wqkv"][2 * H:].T))
    bqkv = jnp.zeros((1, QKV_PAD), jnp.float32)
    bqkv = (bqkv.at[0, :H].set(params["a_bqkv"][:H] * scale)
                 .at[0, H:2 * H].set(params["a_bqkv"][H:2 * H])
                 .at[0, 2 * H:3 * H].set(params["a_bqkv"][2 * H:]))

    # Lane-dense (zero-padded) quantile projection; real outputs live in cols 0..2.
    qpw = jnp.zeros((H, OUT_PAD), jnp.float32).at[:, :3].set(params["qp_w"].T)
    qpb = jnp.zeros((1, OUT_PAD), jnp.float32).at[:, :3].set(params["qp_b"])

    grn_args = (params["g_w1"].T, params["g_b1"].reshape(1, -1),
                params["g_w2"].T, params["g_b2"].reshape(1, -1),
                params["g_wg"].T, params["g_bg"].reshape(1, -1))
    wo = params["a_wo"].T
    bo = params["a_bo"].reshape(1, -1)

    # NOTE: grid-invariant weight/bias blocks could use pipeline_mode=pl.Buffered(1) to
    # save their second pipeline buffer; at H=32 the weights are tiny so it is omitted.
    # TODO(synk): pad/mask ragged L for the gridded path (a padded KV tile without masking
    # would corrupt the online softmax); the fused path below already handles any L.

    # ------------------------------------------------------------------
    # Small-L path: one fused pallas_call (K/V VMEM-resident, single launch).
    # ------------------------------------------------------------------
    if L <= fuse_max_rows:
        fk = functools.partial(fused_kernel, hidden_size=H, num_vars=V,
                               num_heads=nh, mxu_dtype=mxu_dtype)
        y = pl.pallas_call(
            fk,
            grid=(1,),
            out_shape=jax.ShapeDtypeStruct((L, OUT_PAD), jnp.float32),
            in_specs=[
                pl.BlockSpec((L, V * F), lambda i: (0, 0)),
                pl.BlockSpec((V * F, V * H), lambda i: (0, 0)),
                pl.BlockSpec((1, V * H), lambda i: (0, 0)),
                pl.BlockSpec((H, 2 * H), lambda i: (0, 0)),
                pl.BlockSpec((1, 2 * H), lambda i: (0, 0)),
                pl.BlockSpec((2 * H, H), lambda i: (0, 0)),
                pl.BlockSpec((1, H), lambda i: (0, 0)),
                pl.BlockSpec((H, H), lambda i: (0, 0)),
                pl.BlockSpec((1, H), lambda i: (0, 0)),
                pl.BlockSpec((H, QKV_PAD), lambda i: (0, 0)),
                pl.BlockSpec((1, QKV_PAD), lambda i: (0, 0)),
                pl.BlockSpec((H, H), lambda i: (0, 0)),
                pl.BlockSpec((1, H), lambda i: (0, 0)),
                pl.BlockSpec((H, OUT_PAD), lambda i: (0, 0)),
                pl.BlockSpec((1, OUT_PAD), lambda i: (0, 0)),
            ],
            out_specs=pl.BlockSpec((L, OUT_PAD), lambda i: (0, 0)),
            compiler_params=pltpu.CompilerParams(
                dimension_semantics=("arbitrary",),
                vmem_limit_bytes=vmem_limit_bytes),
        )(x_cat, wbd, bcat, *grn_args, wqkv, bqkv, wo, bo, qpw, qpb)
        return y[:, :3]

    # ------------------------------------------------------------------
    # Large-L path: kernel A (row-wise, parallel over L) + kernel B (flash attention).
    # ------------------------------------------------------------------
    TL = _pick_row_tile(L, max_q_tile)       # row tile for kernel A and the q axis
    TQ = TL
    TK = _pick_row_tile(L, max_kv_tile)      # decoupled, smaller kv tile
    assert L % TL == 0 and L % TK == 0

    rw = functools.partial(rowwise_kernel, hidden_size=H, num_vars=V)
    qkv = pl.pallas_call(
        rw,
        grid=(L // TL,),
        out_shape=jax.ShapeDtypeStruct((L, QKV_PAD), mxu_dtype),
        in_specs=[
            pl.BlockSpec((TL, V * F), lambda i: (i, 0)),
            pl.BlockSpec((V * F, V * H), lambda i: (0, 0)),
            pl.BlockSpec((1, V * H), lambda i: (0, 0)),
            pl.BlockSpec((H, 2 * H), lambda i: (0, 0)),
            pl.BlockSpec((1, 2 * H), lambda i: (0, 0)),
            pl.BlockSpec((2 * H, H), lambda i: (0, 0)),
            pl.BlockSpec((1, H), lambda i: (0, 0)),
            pl.BlockSpec((H, H), lambda i: (0, 0)),
            pl.BlockSpec((1, H), lambda i: (0, 0)),
            pl.BlockSpec((H, QKV_PAD), lambda i: (0, 0)),
            pl.BlockSpec((1, QKV_PAD), lambda i: (0, 0)),
        ],
        out_specs=pl.BlockSpec((TL, QKV_PAD), lambda i: (i, 0)),
        compiler_params=pltpu.CompilerParams(
            dimension_semantics=("parallel",),
            vmem_limit_bytes=vmem_limit_bytes),
    )(x_cat, wbd, bcat, *grn_args, wqkv, bqkv)

    ak = functools.partial(attn_kernel, hidden_size=H, num_heads=nh)
    y = pl.pallas_call(
        ak,
        grid=(L // TQ, L // TK),          # kv axis innermost ("arbitrary") — do not reorder
        out_shape=jax.ShapeDtypeStruct((L, OUT_PAD), jnp.float32),
        in_specs=[
            pl.BlockSpec((TQ, QKV_PAD), lambda qi, ki: (qi, 0)),   # q view of qkv
            pl.BlockSpec((TK, QKV_PAD), lambda qi, ki: (ki, 0)),   # k/v view of qkv
            pl.BlockSpec((H, H), lambda qi, ki: (0, 0)),
            pl.BlockSpec((1, H), lambda qi, ki: (0, 0)),
            pl.BlockSpec((H, OUT_PAD), lambda qi, ki: (0, 0)),
            pl.BlockSpec((1, OUT_PAD), lambda qi, ki: (0, 0)),
        ],
        out_specs=pl.BlockSpec((TQ, OUT_PAD), lambda qi, ki: (qi, 0)),
        scratch_shapes=[
            pltpu.VMEM((nh, TQ, hd), mxu_dtype),    # cached q head-split
            pltpu.VMEM((nh, TQ, 1), jnp.float32),   # running max
            pltpu.VMEM((nh, TQ, 1), jnp.float32),   # running denom
            pltpu.VMEM((TQ, H), jnp.float32),       # q-major contiguous accumulator
        ],
        compiler_params=pltpu.CompilerParams(
            dimension_semantics=("parallel", "arbitrary"),
            vmem_limit_bytes=vmem_limit_bytes),
    )(qkv, qkv, wo, bo, qpw, qpb)

    return y[:, :3]


# ----------------------------------------------------------------------------
# Pure-JAX reference mirroring the PyTorch forward exactly.
# ----------------------------------------------------------------------------
def tft_reference(x, params, hidden_size, num_heads):
    H = hidden_size
    L, F, V = x.shape
    inputs = [x[:, :, i] for i in range(V)]
    trans = [inp @ params["vsn_w"][i].T + params["vsn_b"][i] for i, inp in enumerate(inputs)]
    w = jax.nn.softmax(jnp.stack(trans, axis=-1), axis=-1)         # (L, H, V)
    selected = jnp.sum(w * jnp.stack(inputs, axis=-1), axis=-1)    # (L, H)

    h1 = jax.nn.relu(selected @ params["g_w1"].T + params["g_b1"])
    out = h1 @ params["g_w2"].T + params["g_b2"]
    gate = jax.nn.sigmoid(out @ params["g_wg"].T + params["g_bg"])
    processed = gate * out + (1.0 - gate) * selected

    qkv = processed @ params["a_wqkv"].T + params["a_bqkv"]
    q, k, v = qkv[:, :H], qkv[:, H:2 * H], qkv[:, 2 * H:]
    hd = H // num_heads

    def heads(z):
        return z.reshape(L, num_heads, hd).transpose(1, 0, 2)      # (nh, L, hd)

    qh, kh, vh = heads(q), heads(k), heads(v)
    s = jnp.einsum('hld,hmd->hlm', qh, kh) / math.sqrt(hd)
    p = jax.nn.softmax(s, axis=-1)
    a = jnp.einsum('hlm,hmd->hld', p, vh).transpose(1, 0, 2).reshape(L, H)
    attn_out = a @ params["a_wo"].T + params["a_bo"]
    return attn_out @ params["qp_w"].T + params["qp_b"]


if __name__ == "__main__":
    # num_features == hidden_size = 32 (required by the VSN broadcast), 4 heads (hd = 8).
    HIDDEN = 32
    NUM_FEATURES = 32
    NUM_HEADS = 4

    key = jax.random.PRNGKey(0)
    k_x1, k_x2, k_p = jax.random.split(key, 3)
    params = init_params(k_p, NUM_FEATURES, HIDDEN)

    # Case 1: small sequence (L = 8) -> fused single-launch kernel path.
    x1 = jax.random.normal(k_x1, (8, NUM_FEATURES, 4), dtype=jnp.float32)
    out1 = jax.block_until_ready(tft_forward(x1, params, HIDDEN, NUM_HEADS))
    ref1 = tft_reference(x1, params, HIDDEN, NUM_HEADS)
    assert out1.shape == (8, 3), out1.shape
    err1 = float(jnp.max(jnp.abs(out1 - ref1)))
    assert err1 < 5e-3, f"fused path mismatch vs reference: {err1}"

    # Case 2: longer sequence with small tiles -> exercises the gridded two-kernel
    # flash-attention path (grid A: 4 row tiles; grid B: 4x4 q/kv tiles).
    x2 = jax.random.normal(k_x2, (64, NUM_FEATURES, 4), dtype=jnp.float32)
    out2 = jax.block_until_ready(
        tft_forward(x2, params, HIDDEN, NUM_HEADS,
                    max_q_tile=16, max_kv_tile=16, fuse_max_rows=8))
    ref2 = tft_reference(x2, params, HIDDEN, NUM_HEADS)
    assert out2.shape == (64, 3), out2.shape
    err2 = float(jnp.max(jnp.abs(out2 - ref2)))
    assert err2 < 5e-3, f"gridded path mismatch vs reference: {err2}"

    print("KERNEL_OK")
</pallas_src>

<mosaic_0001>
module attributes {stable_mosaic.version = 11 : i64} {
  func.func @fused_kernel(%arg0: i32, %arg1: memref<8x128xf32, #tpu.memory_space<vmem>>, %arg2: memref<128x128xf32, #tpu.memory_space<vmem>>, %arg3: memref<1x128xf32, #tpu.memory_space<vmem>>, %arg4: memref<32x64xf32, #tpu.memory_space<vmem>>, %arg5: memref<1x64xf32, #tpu.memory_space<vmem>>, %arg6: memref<64x32xf32, #tpu.memory_space<vmem>>, %arg7: memref<1x32xf32, #tpu.memory_space<vmem>>, %arg8: memref<32x32xf32, #tpu.memory_space<vmem>>, %arg9: memref<1x32xf32, #tpu.memory_space<vmem>>, %arg10: memref<32x128xf32, #tpu.memory_space<vmem>>, %arg11: memref<1x128xf32, #tpu.memory_space<vmem>>, %arg12: memref<32x32xf32, #tpu.memory_space<vmem>>, %arg13: memref<1x32xf32, #tpu.memory_space<vmem>>, %arg14: memref<32x128xf32, #tpu.memory_space<vmem>>, %arg15: memref<1x128xf32, #tpu.memory_space<vmem>>, %arg16: memref<8x128xf32, #tpu.memory_space<vmem>>) attributes {dimension_semantics = [#tpu.dimension_semantics<arbitrary>], iteration_bounds = array<i64: 1>, scalar_prefetch = 0 : i64, scratch_operands = 0 : i64, tpu.core_type = #tpu.core_type<tc>, window_params = [{pipeline_mode = #tpu.pipeline_mode<synchronous>, transform_indices = @transform_0, window_bounds = array<i64: 8, 128>}, {pipeline_mode = #tpu.pipeline_mode<synchronous>, transform_indices = @transform_1, window_bounds = array<i64: 128, 128>}, {pipeline_mode = #tpu.pipeline_mode<synchronous>, transform_indices = @transform_2, window_bounds = array<i64: 1, 128>}, {pipeline_mode = #tpu.pipeline_mode<synchronous>, transform_indices = @transform_3, window_bounds = array<i64: 32, 64>}, {pipeline_mode = #tpu.pipeline_mode<synchronous>, transform_indices = @transform_4, window_bounds = array<i64: 1, 64>}, {pipeline_mode = #tpu.pipeline_mode<synchronous>, transform_indices = @transform_5, window_bounds = array<i64: 64, 32>}, {pipeline_mode = #tpu.pipeline_mode<synchronous>, transform_indices = @transform_6, window_bounds = array<i64: 1, 32>}, {pipeline_mode = #tpu.pipeline_mode<synchronous>, transform_indices = @transform_7, window_bounds = array<i64: 32, 32>}, {pipeline_mode = #tpu.pipeline_mode<synchronous>, transform_indices = @transform_8, window_bounds = array<i64: 1, 32>}, {pipeline_mode = #tpu.pipeline_mode<synchronous>, transform_indices = @transform_9, window_bounds = array<i64: 32, 128>}, {pipeline_mode = #tpu.pipeline_mode<synchronous>, transform_indices = @transform_10, window_bounds = array<i64: 1, 128>}, {pipeline_mode = #tpu.pipeline_mode<synchronous>, transform_indices = @transform_11, window_bounds = array<i64: 32, 32>}, {pipeline_mode = #tpu.pipeline_mode<synchronous>, transform_indices = @transform_12, window_bounds = array<i64: 1, 32>}, {pipeline_mode = #tpu.pipeline_mode<synchronous>, transform_indices = @transform_13, window_bounds = array<i64: 32, 128>}, {pipeline_mode = #tpu.pipeline_mode<synchronous>, transform_indices = @transform_14, window_bounds = array<i64: 1, 128>}, {pipeline_mode = #tpu.pipeline_mode<synchronous>, transform_indices = @transform_15, window_bounds = array<i64: 8, 128>}]} {
    %c0 = arith.constant 0 : index
    %c0_0 = arith.constant 0 : index
    %0 = vector.load %arg1[%c0, %c0_0] : memref<8x128xf32, #tpu.memory_space<vmem>>, vector<8x128xf32>
    %c0_1 = arith.constant 0 : index
    %c0_2 = arith.constant 0 : index
    %1 = vector.load %arg2[%c0_1, %c0_2] : memref<128x128xf32, #tpu.memory_space<vmem>>, vector<128x128xf32>
    %c0_3 = arith.constant 0 : index
    %c0_4 = arith.constant 0 : index
    %2 = vector.load %arg3[%c0_3, %c0_4] : memref<1x128xf32, #tpu.memory_space<vmem>>, vector<1x128xf32>
    %c0_5 = arith.constant 0 : index
    %c0_6 = arith.constant 0 : index
    %3 = vector.load %arg4[%c0_5, %c0_6] : memref<32x64xf32, #tpu.memory_space<vmem>>, vector<32x64xf32>
    %c0_7 = arith.constant 0 : index
    %c0_8 = arith.constant 0 : index
    %4 = vector.load %arg5[%c0_7, %c0_8] : memref<1x64xf32, #tpu.memory_space<vmem>>, vector<1x64xf32>
    %c0_9 = arith.constant 0 : index
    %c0_10 = arith.constant 0 : index
    %5 = vector.load %arg6[%c0_9, %c0_10] : memref<64x32xf32, #tpu.memory_space<vmem>>, vector<64x32xf32>
    %c0_11 = arith.constant 0 : index
    %c0_12 = arith.constant 0 : index
    %6 = vector.load %arg7[%c0_11, %c0_12] : memref<1x32xf32, #tpu.memory_space<vmem>>, vector<1x32xf32>
    %c0_13 = arith.constant 0 : index
    %c0_14 = arith.constant 0 : index
    %7 = vector.load %arg8[%c0_13, %c0_14] : memref<32x32xf32, #tpu.memory_space<vmem>>, vector<32x32xf32>
    %c0_15 = arith.constant 0 : index
    %c0_16 = arith.constant 0 : index
    %8 = vector.load %arg9[%c0_15, %c0_16] : memref<1x32xf32, #tpu.memory_space<vmem>>, vector<1x32xf32>
    %cst = arith.constant dense<0.000000e+00> : vector<8x128xf32>
    %9 = tpu.matmul %0, %1, %cst {dimension_numbers = #tpu.dot_dimension_numbers<[1], [0], [0], [1], [0, 0, 1, 1], [], []>} : vector<8x128xf32>, vector<128x128xf32>, vector<8x128xf32> -> vector<8x128xf32>
    %10 = vector.broadcast %2 : vector<1x128xf32> to vector<8x128xf32>
    %11 = arith.addf %9, %10 : vector<8x128xf32>
    %c32_i32 = arith.constant 32 : i32
    %12 = tpu.dynamic_rotate %11 by %c32_i32 dim 1 : vector<8x128xf32>, i32 -> vector<8x128xf32>
    %13 = arith.maximumf %11, %12 : vector<8x128xf32>
    %c64_i32 = arith.constant 64 : i32
    %14 = tpu.dynamic_rotate %13 by %c64_i32 dim 1 : vector<8x128xf32>, i32 -> vector<8x128xf32>
    %15 = arith.maximumf %13, %14 : vector<8x128xf32>
    %16 = arith.subf %11, %15 : vector<8x128xf32>
    %17 = math.exp %16 : vector<8x128xf32>
    %c32_i32_17 = arith.constant 32 : i32
    %18 = tpu.dynamic_rotate %17 by %c32_i32_17 dim 1 : vector<8x128xf32>, i32 -> vector<8x128xf32>
    %19 = arith.addf %17, %18 : vector<8x128xf32>
    %c64_i32_18 = arith.constant 64 : i32
    %20 = tpu.dynamic_rotate %19 by %c64_i32_18 dim 1 : vector<8x128xf32>, i32 -> vector<8x128xf32>
    %21 = arith.addf %19, %20 : vector<8x128xf32>
    %22 = arith.mulf %17, %0 : vector<8x128xf32>
    %c32_i32_19 = arith.constant 32 : i32
    %23 = tpu.dynamic_rotate %22 by %c32_i32_19 dim 1 : vector<8x128xf32>, i32 -> vector<8x128xf32>
    %24 = arith.addf %22, %23 : vector<8x128xf32>
    %c64_i32_20 = arith.constant 64 : i32
    %25 = tpu.dynamic_rotate %24 by %c64_i32_20 dim 1 : vector<8x128xf32>, i32 -> vector<8x128xf32>
    %26 = arith.addf %24, %25 : vector<8x128xf32>
    %27 = vector.extract_strided_slice %26 {offsets = [0, 0], sizes = [8, 32], strides = [1, 1]} : vector<8x128xf32> to vector<8x32xf32>
    %28 = vector.extract_strided_slice %21 {offsets = [0, 0], sizes = [8, 32], strides = [1, 1]} : vector<8x128xf32> to vector<8x32xf32>
    %29 = tpu.reciprocal %28 {approx = true} : vector<8x32xf32> -> vector<8x32xf32>
    %30 = arith.mulf %27, %29 : vector<8x32xf32>
    %cst_21 = arith.constant dense<0.000000e+00> : vector<8x64xf32>
    %31 = tpu.matmul %30, %3, %cst_21 {dimension_numbers = #tpu.dot_dimension_numbers<[1], [0], [0], [1], [0, 0, 1, 1], [], []>} : vector<8x32xf32>, vector<32x64xf32>, vector<8x64xf32> -> vector<8x64xf32>
    %32 = vector.broadcast %4 : vector<1x64xf32> to vector<8x64xf32>
    %33 = arith.addf %31, %32 : vector<8x64xf32>
    %cst_22 = arith.constant 0.000000e+00 : f32
    %34 = vector.broadcast %cst_22 : f32 to vector<8x64xf32>
    %35 = arith.maximumf %33, %34 : vector<8x64xf32>
    %cst_23 = arith.constant dense<0.000000e+00> : vector<8x32xf32>
    %36 = tpu.matmul %35, %5, %cst_23 {dimension_numbers = #tpu.dot_dimension_numbers<[1], [0], [0], [1], [0, 0, 1, 1], [], []>} : vector<8x64xf32>, vector<64x32xf32>, vector<8x32xf32> -> vector<8x32xf32>
    %37 = vector.broadcast %6 : vector<1x32xf32> to vector<8x32xf32>
    %38 = arith.addf %36, %37 : vector<8x32xf32>
    %cst_24 = arith.constant dense<0.000000e+00> : vector<8x32xf32>
    %39 = tpu.matmul %38, %7, %cst_24 {dimension_numbers = #tpu.dot_dimension_numbers<[1], [0], [0], [1], [0, 0, 1, 1], [], []>} : vector<8x32xf32>, vector<32x32xf32>, vector<8x32xf32> -> vector<8x32xf32>
    %40 = vector.broadcast %8 : vector<1x32xf32> to vector<8x32xf32>
    %41 = arith.addf %39, %40 : vector<8x32xf32>
    %42 = arith.negf %41 : vector<8x32xf32>
    %43 = math.exp %42 : vector<8x32xf32>
    %cst_25 = arith.constant 1.000000e+00 : f32
    %44 = vector.broadcast %cst_25 : f32 to vector<8x32xf32>
    %45 = arith.addf %44, %43 : vector<8x32xf32>
    %46 = arith.divf %44, %45 : vector<8x32xf32>
    %47 = arith.mulf %46, %38 : vector<8x32xf32>
    %cst_26 = arith.constant 1.000000e+00 : f32
    %48 = vector.broadcast %cst_26 : f32 to vector<8x32xf32>
    %49 = arith.subf %48, %46 : vector<8x32xf32>
    %50 = arith.mulf %49, %30 : vector<8x32xf32>
    %51 = arith.addf %47, %50 : vector<8x32xf32>
    %c0_27 = arith.constant 0 : index
    %c0_28 = arith.constant 0 : index
    %52 = vector.load %arg10[%c0_27, %c0_28] : memref<32x128xf32, #tpu.memory_space<vmem>>, vector<32x128xf32>
    %cst_29 = arith.constant dense<0.000000e+00> : vector<8x128xf32>
    %53 = tpu.matmul %51, %52, %cst_29 {dimension_numbers = #tpu.dot_dimension_numbers<[1], [0], [0], [1], [0, 0, 1, 1], [], []>} : vector<8x32xf32>, vector<32x128xf32>, vector<8x128xf32> -> vector<8x128xf32>
    %c0_30 = arith.constant 0 : index
    %c0_31 = arith.constant 0 : index
    %54 = vector.load %arg11[%c0_30, %c0_31] : memref<1x128xf32, #tpu.memory_space<vmem>>, vector<1x128xf32>
    %55 = vector.broadcast %54 : vector<1x128xf32> to vector<8x128xf32>
    %56 = arith.addf %53, %55 : vector<8x128xf32>
    %57 = vector.extract_strided_slice %56 {offsets = [0, 0], sizes = [8, 32], strides = [1, 1]} : vector<8x128xf32> to vector<8x32xf32>
    %58 = vector.shape_cast %57 : vector<8x32xf32> to vector<8x4x8xf32>
    %59 = tpu.transpose %58, [1, 0, 2] : vector<8x4x8xf32> -> vector<4x8x8xf32>
    %60 = vector.extract_strided_slice %56 {offsets = [0, 32], sizes = [8, 32], strides = [1, 1]} : vector<8x128xf32> to vector<8x32xf32>
    %61 = vector.shape_cast %60 : vector<8x32xf32> to vector<8x4x8xf32>
    %62 = tpu.transpose %61, [1, 0, 2] : vector<8x4x8xf32> -> vector<4x8x8xf32>
    %63 = vector.extract_strided_slice %56 {offsets = [0, 64], sizes = [8, 32], strides = [1, 1]} : vector<8x128xf32> to vector<8x32xf32>
    %64 = vector.shape_cast %63 : vector<8x32xf32> to vector<8x4x8xf32>
    %65 = tpu.transpose %64, [1, 0, 2] : vector<8x4x8xf32> -> vector<4x8x8xf32>
    "tpu.trace_start"() <{level = 10 : i32, message = "hqd,hkd->hqk"}> : () -> ()
    %cst_32 = arith.constant dense<0.000000e+00> : vector<4x8x8xf32>
    %66 = tpu.matmul %59, %62, %cst_32 {dimension_numbers = #tpu.dot_dimension_numbers<[2], [2], [1], [1], [0, 0, 0, 1, 1, 1], [0], [0]>} : vector<4x8x8xf32>, vector<4x8x8xf32>, vector<4x8x8xf32> -> vector<4x8x8xf32>
    "tpu.trace_stop"() : () -> ()
    %cst_33 = arith.constant dense<0xFF800000> : vector<4x8xf32>
    %67 = vector.multi_reduction <maximumf>, %66, %cst_33 [2] : vector<4x8x8xf32> to vector<4x8xf32>
    %68 = vector.shape_cast %67 : vector<4x8xf32> to vector<4x8x1xf32>
    %69 = vector.broadcast %68 : vector<4x8x1xf32> to vector<4x8x8xf32>
    %70 = arith.subf %66, %69 : vector<4x8x8xf32>
    %71 = math.exp %70 : vector<4x8x8xf32>
    %cst_34 = arith.constant dense<0.000000e+00> : vector<4x8xf32>
    %72 = vector.multi_reduction <add>, %71, %cst_34 [2] : vector<4x8x8xf32> to vector<4x8xf32>
    %73 = vector.shape_cast %72 : vector<4x8xf32> to vector<4x8x1xf32>
    "tpu.trace_start"() <{level = 10 : i32, message = "hqk,hkd->qhd"}> : () -> ()
    %cst_35 = arith.constant dense<0.000000e+00> : vector<4x8x8xf32>
    %74 = tpu.matmul %65, %71, %cst_35 {dimension_numbers = #tpu.dot_dimension_numbers<[1], [2], [2], [1], [0, 0, 0, 2, 1, 1], [0], [0]>} : vector<4x8x8xf32>, vector<4x8x8xf32>, vector<4x8x8xf32> -> vector<4x8x8xf32>
    %75 = tpu.transpose %74, [2, 0, 1] : vector<4x8x8xf32> -> vector<8x4x8xf32>
    "tpu.trace_stop"() : () -> ()
    %cst_36 = arith.constant 1.000000e+00 : f32
    %76 = vector.broadcast %cst_36 : f32 to vector<4x8x1xf32>
    %77 = arith.divf %76, %73 : vector<4x8x1xf32>
    %78 = tpu.transpose %77, [1, 0, 2] : vector<4x8x1xf32> -> vector<8x4x1xf32>
    %79 = vector.broadcast %78 : vector<8x4x1xf32> to vector<8x4x8xf32>
    %80 = arith.mulf %75, %79 : vector<8x4x8xf32>
    %81 = vector.shape_cast %80 : vector<8x4x8xf32> to vector<8x32xf32>
    %c0_37 = arith.constant 0 : index
    %c0_38 = arith.constant 0 : index
    %82 = vector.load %arg12[%c0_37, %c0_38] : memref<32x32xf32, #tpu.memory_space<vmem>>, vector<32x32xf32>
    %cst_39 = arith.constant dense<0.000000e+00> : vector<8x32xf32>
    %83 = tpu.matmul %81, %82, %cst_39 {dimension_numbers = #tpu.dot_dimension_numbers<[1], [0], [0], [1], [0, 0, 1, 1], [], []>} : vector<8x32xf32>, vector<32x32xf32>, vector<8x32xf32> -> vector<8x32xf32>
    %c0_40 = arith.constant 0 : index
    %c0_41 = arith.constant 0 : index
    %84 = vector.load %arg13[%c0_40, %c0_41] : memref<1x32xf32, #tpu.memory_space<vmem>>, vector<1x32xf32>
    %85 = vector.broadcast %84 : vector<1x32xf32> to vector<8x32xf32>
    %86 = arith.addf %83, %85 : vector<8x32xf32>
    %c0_42 = arith.constant 0 : index
    %c0_43 = arith.constant 0 : index
    %87 = vector.load %arg14[%c0_42, %c0_43] : memref<32x128xf32, #tpu.memory_space<vmem>>, vector<32x128xf32>
    %cst_44 = arith.constant dense<0.000000e+00> : vector<8x128xf32>
    %88 = tpu.matmul %86, %87, %cst_44 {dimension_numbers = #tpu.dot_dimension_numbers<[1], [0], [0], [1], [0, 0, 1, 1], [], []>} : vector<8x32xf32>, vector<32x128xf32>, vector<8x128xf32> -> vector<8x128xf32>
    %c0_45 = arith.constant 0 : index
    %c0_46 = arith.constant 0 : index
    %89 = vector.load %arg15[%c0_45, %c0_46] : memref<1x128xf32, #tpu.memory_space<vmem>>, vector<1x128xf32>
    %90 = vector.broadcast %89 : vector<1x128xf32> to vector<8x128xf32>
    %91 = arith.addf %88, %90 : vector<8x128xf32>
    %c0_47 = arith.constant 0 : index
    %c0_48 = arith.constant 0 : index
    %92 = vector.load %arg16[%c0_47, %c0_48] : memref<8x128xf32, #tpu.memory_space<vmem>>, vector<8x128xf32>
    tpu.vector_store %arg16[%c0_47, %c0_48], %91 {strides = array<i32>} : memref<8x128xf32, #tpu.memory_space<vmem>>, vector<8x128xf32>,
    return
  }
  func.func @transform_0(%arg0: i32) -> (i32, i32) {
    %c0_i32 = arith.constant 0 : i32
    %c0_i32_0 = arith.constant 0 : i32
    %c0_i32_1 = arith.constant 0 : i32
    return %c0_i32, %c0_i32_0 : i32, i32
  }
  func.func @transform_1(%arg0: i32) -> (i32, i32) {
    %c0_i32 = arith.constant 0 : i32
    %c0_i32_0 = arith.constant 0 : i32
    %c0_i32_1 = arith.constant 0 : i32
    return %c0_i32, %c0_i32_0 : i32, i32
  }
  func.func @transform_2(%arg0: i32) -> (i32, i32) {
    %c0_i32 = arith.constant 0 : i32
    %c0_i32_0 = arith.constant 0 : i32
    %c0_i32_1 = arith.constant 0 : i32
    return %c0_i32, %c0_i32_0 : i32, i32
  }
  func.func @transform_3(%arg0: i32) -> (i32, i32) {
    %c0_i32 = arith.constant 0 : i32
    %c0_i32_0 = arith.constant 0 : i32
    %c0_i32_1 = arith.constant 0 : i32
    return %c0_i32, %c0_i32_0 : i32, i32
  }
  func.func @transform_4(%arg0: i32) -> (i32, i32) {
    %c0_i32 = arith.constant 0 : i32
    %c0_i32_0 = arith.constant 0 : i32
    %c0_i32_1 = arith.constant 0 : i32
    return %c0_i32, %c0_i32_0 : i32, i32
  }
  func.func @transform_5(%arg0: i32) -> (i32, i32) {
    %c0_i32 = arith.constant 0 : i32
    %c0_i32_0 = arith.constant 0 : i32
    %c0_i32_1 = arith.constant 0 : i32
    return %c0_i32, %c0_i32_0 : i32, i32
  }
  func.func @transform_6(%arg0: i32) -> (i32, i32) {
    %c0_i32 = arith.constant 0 : i32
    %c0_i32_0 = arith.constant 0 : i32
    %c0_i32_1 = arith.constant 0 : i32
    return %c0_i32, %c0_i32_0 : i32, i32
  }
  func.func @transform_7(%arg0: i32) -> (i32, i32) {
    %c0_i32 = arith.constant 0 : i32
    %c0_i32_0 = arith.constant 0 : i32
    %c0_i32_1 = arith.constant 0 : i32
    return %c0_i32, %c0_i32_0 : i32, i32
  }
  func.func @transform_8(%arg0: i32) -> (i32, i32) {
    %c0_i32 = arith.constant 0 : i32
    %c0_i32_0 = arith.constant 0 : i32
    %c0_i32_1 = arith.constant 0 : i32
    return %c0_i32, %c0_i32_0 : i32, i32
  }
  func.func @transform_9(%arg0: i32) -> (i32, i32) {
    %c0_i32 = arith.constant 0 : i32
    %c0_i32_0 = arith.constant 0 : i32
    %c0_i32_1 = arith.constant 0 : i32
    return %c0_i32, %c0_i32_0 : i32, i32
  }
  func.func @transform_10(%arg0: i32) -> (i32, i32) {
    %c0_i32 = arith.constant 0 : i32
    %c0_i32_0 = arith.constant 0 : i32
    %c0_i32_1 = arith.constant 0 : i32
    return %c0_i32, %c0_i32_0 : i32, i32
  }
  func.func @transform_11(%arg0: i32) -> (i32, i32) {
    %c0_i32 = arith.constant 0 : i32
    %c0_i32_0 = arith.constant 0 : i32
    %c0_i32_1 = arith.constant 0 : i32
    return %c0_i32, %c0_i32_0 : i32, i32
  }
  func.func @transform_12(%arg0: i32) -> (i32, i32) {
    %c0_i32 = arith.constant 0 : i32
    %c0_i32_0 = arith.constant 0 : i32
    %c0_i32_1 = arith.constant 0 : i32
    return %c0_i32, %c0_i32_0 : i32, i32
  }
  func.func @transform_13(%arg0: i32) -> (i32, i32) {
    %c0_i32 = arith.constant 0 : i32
    %c0_i32_0 = arith.constant 0 : i32
    %c0_i32_1 = arith.constant 0 : i32
    return %c0_i32, %c0_i32_0 : i32, i32
  }
  func.func @transform_14(%arg0: i32) -> (i32, i32) {
    %c0_i32 = arith.constant 0 : i32
    %c0_i32_0 = arith.constant 0 : i32
    %c0_i32_1 = arith.constant 0 : i32
    return %c0_i32, %c0_i32_0 : i32, i32
  }
  func.func @transform_15(%arg0: i32) -> (i32, i32) {
    %c0_i32 = arith.constant 0 : i32
    %c0_i32_0 = arith.constant 0 : i32
    %c0_i32_1 = arith.constant 0 : i32
    return %c0_i32, %c0_i32_0 : i32, i32
  }
}

</mosaic_0001>

<llo_original>
// kernel: tpu_custom_call.1
$region0: #{tpu_custom_call.1}
  #allocation0 [shape = 'u32[]', space=smem, size = 0x4, offset = 0x4, fixed_abs, tag = 'smem constant byte address 0x4 - core index']
  #allocation1 [shape = 'u32[72,128]{1,0:T(1,128)}', space=vmem, size = 0x9000, scoped, tag = 'internal scratch']
  %s0 = inlined_call_operand.hbm [shape: f32[8,128], index: 0, kind: input, shape index: {}]
  %s1 = inlined_call_operand.hbm [shape: f32[128,128], index: 1, kind: input, shape index: {}]
  %s2 = inlined_call_operand.vmem [shape: f32[1,128], index: 2, kind: input, shape index: {}]
  %s3 = inlined_call_operand.vmem [shape: f32[32,64], index: 3, kind: input, shape index: {}]
  %s4 = inlined_call_operand.vmem [shape: f32[1,64], index: 4, kind: input, shape index: {}]
  %s5 = inlined_call_operand.vmem [shape: f32[64,32], index: 5, kind: input, shape index: {}]
  %s6 = inlined_call_operand.vmem [shape: f32[1,32], index: 6, kind: input, shape index: {}]
  %s7 = inlined_call_operand.vmem [shape: f32[32,32], index: 7, kind: input, shape index: {}]
  %s8 = inlined_call_operand.vmem [shape: f32[1,32], index: 8, kind: input, shape index: {}]
  %s9 = inlined_call_operand.vmem [shape: f32[32,128], index: 9, kind: input, shape index: {}]
  %s10 = inlined_call_operand.vmem [shape: f32[1,128], index: 10, kind: input, shape index: {}]
  %s11 = inlined_call_operand.hbm [shape: f32[32,32], index: 11, kind: input, shape index: {}]
  %s12 = inlined_call_operand.vmem [shape: f32[1,32], index: 12, kind: input, shape index: {}]
  %s13 = inlined_call_operand.hbm [shape: f32[32,128], index: 13, kind: input, shape index: {}]
  %s14 = inlined_call_operand.vmem [shape: f32[1,128], index: 14, kind: input, shape index: {}]
  %s15 = inlined_call_operand.hbm [shape: f32[8,128], index: 15, kind: output, shape index: {}]
  %s16 = sld [smem:[#allocation0]]
  $region86: #{tpu_custom_call.1} parent=0
    _
  %s18 = ssub.s32 1, %s16
  %s19 = scalar_select 0, %s18, %s16
  $region1: #{tpu_custom_call.1} parent=0
    #allocation2 [shape = 'u8[4096]{0}', space=vmem, size = 0x1000, scoped, tag = 'input window, operand 0, single buffered']
    #allocation3 [shape = 's32[1]{0}', space=sflag, size = 0x4, scoped, tag = 'scoped memory for tpu_custom_call.1']
    #allocation4 [shape = 's32[1]{0}', space=sflag, size = 0x4, scoped, tag = 'scoped memory for tpu_custom_call.1']
    #allocation5 [shape = 'u8[65536]{0}', space=vmem, size = 0x10000, scoped, tag = 'input window, operand 1, single buffered']
    #allocation6 [shape = 's32[1]{0}', space=sflag, size = 0x4, scoped, tag = 'scoped memory for tpu_custom_call.1']
    #allocation7 [shape = 'u8[16384]{0}', space=vmem, size = 0x4000, scoped, tag = 'input window, operand 11, single buffered']
    #allocation8 [shape = 'u8[16384]{0}', space=vmem, size = 0x4000, scoped, tag = 'input window, operand 13, single buffered']
    #allocation9 [shape = 's32[1]{0}', space=sflag, size = 0x4, scoped, tag = 'scoped memory for tpu_custom_call.1']
    #allocation10 [shape = 'u8[4096]{0}', space=vmem, size = 0x1000, scoped, tag = 'output window, operand 0, single buffered']
    %20 = vsyncpa [#allocation3], 0
    %21 = vsyncpa [#allocation6], 0
    %22 = vsyncpa [#allocation9], 0
    %23 = vsyncpa [#allocation4], 0
    // Predicated region
    $region2: #{tpu_custom_call.1} parent=1 // pred_check
      _
    $region3: #{tpu_custom_call.1} parent=1 // pred_check_branch
      %25 = sbr.rel (0) target = $region5
    $region4: #{tpu_custom_call.1} parent=1 // pred_region
      %27 = vsyncadd [#allocation3], 0
      %s29 = sshll.u32 %s0, 4
      %s30 = int_to_ptr.hbm [resolvable:$true] %s29
      %s31 = sshll.u32 [#allocation2], 4
      %s32 = int_to_ptr.vmem [resolvable:$true] %s31
      %34 = dma.hbm_to_vmem [thread:$0]  %s30, 128, %s32, [#allocation3]
    $region5: #{tpu_custom_call.1} parent=1 // pred_fallthru
      _
    // Predicated region
    $region6: #{tpu_custom_call.1} parent=1 // pred_check
      _
    $region7: #{tpu_custom_call.1} parent=1 // pred_check_branch
      %36 = sbr.rel (0) target = $region9
    $region8: #{tpu_custom_call.1} parent=1 // pred_region
      %38 = vsyncadd [#allocation6], 0
      %s39 = sshll.u32 %s1, 4
      %s40 = int_to_ptr.hbm [resolvable:$true] %s39
      %s41 = sshll.u32 [#allocation5], 4
      %s42 = int_to_ptr.vmem [resolvable:$true] %s41
      %47 = dma.hbm_to_vmem [thread:$0]  %s40, 2048, %s42, [#allocation6], 128, 128, 8
    $region9: #{tpu_custom_call.1} parent=1 // pred_fallthru
      _
    // Predicated region
    $region10: #{tpu_custom_call.1} parent=1 // pred_check
      _
    $region11: #{tpu_custom_call.1} parent=1 // pred_check_branch
      %49 = sbr.rel (0) target = $region13
    $region12: #{tpu_custom_call.1} parent=1 // pred_region
      _
    $region13: #{tpu_custom_call.1} parent=1 // pred_fallthru
      _
    // Predicated region
    $region14: #{tpu_custom_call.1} parent=1 // pred_check
      _
    $region15: #{tpu_custom_call.1} parent=1 // pred_check_branch
      %51 = sbr.rel (0) target = $region17
    $region16: #{tpu_custom_call.1} parent=1 // pred_region
      _
    $region17: #{tpu_custom_call.1} parent=1 // pred_fallthru
      _
    // Predicated region
    $region18: #{tpu_custom_call.1} parent=1 // pred_check
      _
    $region19: #{tpu_custom_call.1} parent=1 // pred_check_branch
      %53 = sbr.rel (0) target = $region21
    $region20: #{tpu_custom_call.1} parent=1 // pred_region
      _
    $region21: #{tpu_custom_call.1} parent=1 // pred_fallthru
      _
    // Predicated region
    $region22: #{tpu_custom_call.1} parent=1 // pred_check
      _
    $region23: #{tpu_custom_call.1} parent=1 // pred_check_branch
      %55 = sbr.rel (0) target = $region25
    $region24: #{tpu_custom_call.1} parent=1 // pred_region
      _
    $region25: #{tpu_custom_call.1} parent=1 // pred_fallthru
      _
    // Predicated region
    $region26: #{tpu_custom_call.1} parent=1 // pred_check
      _
    $region27: #{tpu_custom_call.1} parent=1 // pred_check_branch
      %57 = sbr.rel (0) target = $region29
    $region28: #{tpu_custom_call.1} parent=1 // pred_region
      _
    $region29: #{tpu_custom_call.1} parent=1 // pred_fallthru
      _
    // Predicated region
    $region30: #{tpu_custom_call.1} parent=1 // pred_check
      _
    $region31: #{tpu_custom_call.1} parent=1 // pred_check_branch
      %59 = sbr.rel (0) target = $region33
    $region32: #{tpu_custom_call.1} parent=1 // pred_region
      _
    $region33: #{tpu_custom_call.1} parent=1 // pred_fallthru
      _
    // Predicated region
    $region34: #{tpu_custom_call.1} parent=1 // pred_check
      _
    $region35: #{tpu_custom_call.1} parent=1 // pred_check_branch
      %61 = sbr.rel (0) target = $region37
    $region36: #{tpu_custom_call.1} parent=1 // pred_region
      _
    $region37: #{tpu_custom_call.1} parent=1 // pred_fallthru
      _
    // Predicated region
    $region38: #{tpu_custom_call.1} parent=1 // pred_check
      _
    $region39: #{tpu_custom_call.1} parent=1 // pred_check_branch
      %63 = sbr.rel (0) target = $region41
    $region40: #{tpu_custom_call.1} parent=1 // pred_region
      _
    $region41: #{tpu_custom_call.1} parent=1 // pred_fallthru
      _
    // Predicated region
    $region42: #{tpu_custom_call.1} parent=1 // pred_check
      _
    $region43: #{tpu_custom_call.1} parent=1 // pred_check_branch
      %65 = sbr.rel (0) target = $region45
    $region44: #{tpu_custom_call.1} parent=1 // pred_region
      _
    $region45: #{tpu_custom_call.1} parent=1 // pred_fallthru
      _
    // Predicated region
    $region46: #{tpu_custom_call.1} parent=1 // pred_check
      _
    $region47: #{tpu_custom_call.1} parent=1 // pred_check_branch
      %67 = sbr.rel (0) target = $region49
    $region48: #{tpu_custom_call.1} parent=1 // pred_region
      %69 = vsyncadd [#allocation6], 0
      %s70 = sshll.u32 %s11, 4
      %s71 = int_to_ptr.hbm [resolvable:$true] %s70
      %s72 = sshll.u32 [#allocation7], 4
      %s73 = int_to_ptr.vmem [resolvable:$true] %s72
      %78 = dma.hbm_to_vmem [thread:$0]  %s71, 512, %s73, [#allocation6], 128, 128, 8
    $region49: #{tpu_custom_call.1} parent=1 // pred_fallthru
      _
    // Predicated region
    $region50: #{tpu_custom_call.1} parent=1 // pred_check
      _
    $region51: #{tpu_custom_call.1} parent=1 // pred_check_branch
      %80 = sbr.rel (0) target = $region53
    $region52: #{tpu_custom_call.1} parent=1 // pred_region
      _
    $region53: #{tpu_custom_call.1} parent=1 // pred_fallthru
      _
    // Predicated region
    $region54: #{tpu_custom_call.1} parent=1 // pred_check
      _
    $region55: #{tpu_custom_call.1} parent=1 // pred_check_branch
      %82 = sbr.rel (0) target = $region57
    $region56: #{tpu_custom_call.1} parent=1 // pred_region
      %84 = vsyncadd [#allocation9], 0
      %s85 = sshll.u32 %s13, 4
      %s86 = int_to_ptr.hbm [resolvable:$true] %s85
      %s87 = sshll.u32 [#allocation8], 4
      %s88 = int_to_ptr.vmem [resolvable:$true] %s87
      %93 = dma.hbm_to_vmem [thread:$0]  %s86, 512, %s88, [#allocation9], 128, 128, 8
    $region57: #{tpu_custom_call.1} parent=1 // pred_fallthru
      _
    // Predicated region
    $region58: #{tpu_custom_call.1} parent=1 // pred_check
      _
    $region59: #{tpu_custom_call.1} parent=1 // pred_check_branch
      %95 = sbr.rel (0) target = $region61
    $region60: #{tpu_custom_call.1} parent=1 // pred_region
      _
    $region61: #{tpu_custom_call.1} parent=1 // pred_fallthru
      _
    // Predicated region
    $region62: #{tpu_custom_call.1} parent=1 // pred_check
      _
    $region63: #{tpu_custom_call.1} parent=1 // pred_check_branch
      %97 = sbr.rel (0) target = $region65
    $region64: #{tpu_custom_call.1} parent=1 // pred_region
      %99 = dma.done [#allocation3], 128
    $region65: #{tpu_custom_call.1} parent=1 // pred_fallthru
      _
    // Predicated region
    $region66: #{tpu_custom_call.1} parent=1 // pred_check
      _
    $region67: #{tpu_custom_call.1} parent=1 // pred_check_branch
      %101 = sbr.rel (0) target = $region69
    $region68: #{tpu_custom_call.1} parent=1 // pred_region
      %103 = dma.done [#allocation6], 2048
    $region69: #{tpu_custom_call.1} parent=1 // pred_fallthru
      _
    // Predicated region
    $region70: #{tpu_custom_call.1} parent=1 // pred_check
      _
    $region71: #{tpu_custom_call.1} parent=1 // pred_check_branch
      %105 = sbr.rel (0) target = $region73
    $region72: #{tpu_custom_call.1} parent=1 // pred_region
      %107 = dma.done [#allocation6], 512
    $region73: #{tpu_custom_call.1} parent=1 // pred_fallthru
      _
    // Predicated region
    $region74: #{tpu_custom_call.1} parent=1 // pred_check
      _
    $region75: #{tpu_custom_call.1} parent=1 // pred_check_branch
      %109 = sbr.rel (0) target = $region77
    $region76: #{tpu_custom_call.1} parent=1 // pred_region
      %111 = dma.done [#allocation9], 512
    $region77: #{tpu_custom_call.1} parent=1 // pred_fallthru
      _
    %v112 = vld [vmem:[#allocation2] sm:$0xff]
    %v113 = vld [vmem:[#allocation5] sm:$0xff]
    %v114 = vld [vmem:[#allocation5 + $0x8] sm:$0xff]
    %v115 = vld [vmem:[#allocation5 + $0x10] sm:$0xff]
    %v116 = vld [vmem:[#allocation5 + $0x18] sm:$0xff]
    %v117 = vld [vmem:[#allocation5 + $0x20] sm:$0xff]
    %v118 = vld [vmem:[#allocation5 + $0x28] sm:$0xff]
    %v119 = vld [vmem:[#allocation5 + $0x30] sm:$0xff]
    %v120 = vld [vmem:[#allocation5 + $0x38] sm:$0xff]
    %v121 = vld [vmem:[#allocation5 + $0x40] sm:$0xff]
    %v122 = vld [vmem:[#allocation5 + $0x48] sm:$0xff]
    %v123 = vld [vmem:[#allocation5 + $0x50] sm:$0xff]
    %v124 = vld [vmem:[#allocation5 + $0x58] sm:$0xff]
    %v125 = vld [vmem:[#allocation5 + $0x60] sm:$0xff]
    %v126 = vld [vmem:[#allocation5 + $0x68] sm:$0xff]
    %v127 = vld [vmem:[#allocation5 + $0x70] sm:$0xff]
    %v128 = vld [vmem:[#allocation5 + $0x78] sm:$0xff]
    %v129 = vld [vmem:[%s2] sm:$0x1]
    %v130 = vld [vmem:[%s3] sm:$0xff]
    %v131 = vld [vmem:[%s3 + $0x8] sm:$0xff]
    %v132 = vld [vmem:[%s3 + $0x10] sm:$0xff]
    %v133 = vld [vmem:[%s3 + $0x18] sm:$0xff]
    %v134 = vld [vmem:[%s4] sm:$0x1]
    %v135 = vld [vmem:[%s5] sm:$0xff]
    %v136 = vld [vmem:[%s5 + $0x8] sm:$0xff]
    %v137 = vld [vmem:[%s5 + $0x10] sm:$0xff]
    %v138 = vld [vmem:[%s5 + $0x18] sm:$0xff]
    %v139 = vld [vmem:[%s5 + $0x20] sm:$0xff]
    %v140 = vld [vmem:[%s5 + $0x28] sm:$0xff]
    %v141 = vld [vmem:[%s5 + $0x30] sm:$0xff]
    %v142 = vld [vmem:[%s5 + $0x38] sm:$0xff]
    %v143 = vld [vmem:[%s6] sm:$0x1]
    %v144 = vld [vmem:[%s7] sm:$0xff]
    %v145 = vld [vmem:[%s7 + $0x8] sm:$0xff]
    %v146 = vld [vmem:[%s7 + $0x10] sm:$0xff]
    %v147 = vld [vmem:[%s7 + $0x18] sm:$0xff]
    %v148 = vld [vmem:[%s8] sm:$0x1]
    %v150 = vperm.slane %v129, 0
    %152 = vmatpush.msra.mxu0 %v128
    %153 = vmatpush.msra.mxu0 %v127
    %154 = vmatpush.msra.mxu0 %v126
    %155 = vmatpush.msra.mxu0 %v125
    %156 = vmatpush.msra.mxu0 %v124
    %157 = vmatpush.msra.mxu0 %v123
    %158 = vmatpush.msra.mxu0 %v122
    %159 = vmatpush.msra.mxu0 %v121
    %160 = vmatpush.msra.mxu0 %v120
    %161 = vmatpush.msra.mxu0 %v119
    %162 = vmatpush.msra.mxu0 %v118
    %163 = vmatpush.msra.mxu0 %v117
    %164 = vmatpush.msra.mxu0 %v116
    %165 = vmatpush.msra.mxu0 %v115
    %166 = vmatpush.msra.mxu0 %v114
    %167 = vmatpush.msra.mxu0 %v113
    %168 = vmatmul.f32.gmra.mxu0 %v112
    %v169 = vpop.f32.mrf.mxu0
    %v170 = vadd.f32 %v150, %v169
    %171 = vdwg.mxu0
    %172 = vrot.lane.b32.xlu0 %v170, 32
    %v173 = vpop.permute.xlu0 %172
    %v174 = vmax.f32 %v170, %v173
    %175 = vrot.lane.b32.xlu0 %v174, 64
    %v176 = vpop.permute.xlu0 %175
    %v177 = vmax.f32 %v174, %v176
    %v178 = vsub.f32 %v170, %v177
    %v179 = vmul.f32 %v178, 1.442695
    %v180 = vpow.pop %v179
    %181 = vrot.lane.b32.xlu0 %v180, 32
    %v182 = vpop.permute.xlu0 %181
    %v183 = vadd.f32 %v180, %v182
    %184 = vrot.lane.b32.xlu0 %v183, 64
    %v185 = vpop.permute.xlu0 %184
    %v186 = vadd.f32 %v183, %v185
    %v187 = vmul.f32 %v180, %v112
    %188 = vrot.lane.b32.xlu0 %v187, 32
    %v189 = vpop.permute.xlu0 %188
    %v190 = vadd.f32 %v187, %v189
    %191 = vrot.lane.b32.xlu0 %v190, 64
    %v192 = vpop.permute.xlu0 %191
    %v193 = vadd.f32 %v190, %v192
    %v194 = vrcp.pop %v186
    %v195 = vmul.f32 %v193, %v194
    %v197 = vperm.slane %v134, 0
    %vm199 = vcmask 261120
    %v201 = vsel %vm199, %v195, 0
    %203 = vmatpush.msra.mxu0 0.0
    %204 = vmatpush.msra.mxu0 0.0
    %205 = vmatpush.msra.mxu0 0.0
    %206 = vmatpush.msra.mxu0 0.0
    %207 = vmatpush.msra.mxu0 0.0
    %208 = vmatpush.msra.mxu0 0.0
    %209 = vmatpush.msra.mxu0 0.0
    %210 = vmatpush.msra.mxu0 0.0
    %211 = vmatpush.msra.mxu0 0.0
    %212 = vmatpush.msra.mxu0 0.0
    %213 = vmatpush.msra.mxu0 0.0
    %214 = vmatpush.msra.mxu0 0.0
    %215 = vmatpush.msra.mxu0 %v133
    %216 = vmatpush.msra.mxu0 %v132
    %217 = vmatpush.msra.mxu0 %v131
    %218 = vmatpush.msra.mxu0 %v130
    %219 = vmatmul.f32.gmra.mxu0 %v201
    %v220 = vpop.f32.mrf.mxu0
    %v221 = vadd.f32 %v197, %v220
    %222 = vdwg.mxu0
    %v223 = vmax.f32 %v221, 0.0
    %v225 = vperm.slane %v143, 0
    %vm227 = vcmask 523264
    %v229 = vsel %vm227, %v223, 0
    %231 = vmatpush.msra.mxu0 0.0
    %232 = vmatpush.msra.mxu0 0.0
    %233 = vmatpush.msra.mxu0 0.0
    %234 = vmatpush.msra.mxu0 0.0
    %235 = vmatpush.msra.mxu0 0.0
    %236 = vmatpush.msra.mxu0 0.0
    %237 = vmatpush.msra.mxu0 0.0
    %238 = vmatpush.msra.mxu0 0.0
    %239 = vmatpush.msra.mxu0 %v142
    %240 = vmatpush.msra.mxu0 %v141
    %241 = vmatpush.msra.mxu0 %v140
    %242 = vmatpush.msra.mxu0 %v139
    %243 = vmatpush.msra.mxu0 %v138
    %244 = vmatpush.msra.mxu0 %v137
    %245 = vmatpush.msra.mxu0 %v136
    %246 = vmatpush.msra.mxu0 %v135
    %247 = vmatmul.f32.gmra.mxu0 %v229
    %v248 = vpop.f32.mrf.mxu0
    %v249 = vadd.f32 %v225, %v248
    %250 = vdwg.mxu0
    %v252 = vperm.slane %v148, 0
    %v255 = vsel %vm199, %v249, 0
    %257 = vmatpush.msra.mxu0 0.0
    %258 = vmatpush.msra.mxu0 0.0
    %259 = vmatpush.msra.mxu0 0.0
    %260 = vmatpush.msra.mxu0 0.0
    %261 = vmatpush.msra.mxu0 0.0
    %262 = vmatpush.msra.mxu0 0.0
    %263 = vmatpush.msra.mxu0 0.0
    %264 = vmatpush.msra.mxu0 0.0
    %265 = vmatpush.msra.mxu0 0.0
    %266 = vmatpush.msra.mxu0 0.0
    %267 = vmatpush.msra.mxu0 0.0
    %268 = vmatpush.msra.mxu0 0.0
    %269 = vmatpush.msra.mxu0 %v147
    %270 = vmatpush.msra.mxu0 %v146
    %271 = vmatpush.msra.mxu0 %v145
    %272 = vmatpush.msra.mxu0 %v144
    %273 = vmatmul.f32.gmra.mxu0 %v255
    %v274 = vpop.f32.mrf.mxu0
    %v275 = vadd.f32 %v252, %v274
    %276 = vdwg.mxu0
    %v277 = vxor.u32 %v275, 2147483648
    %v278 = vmul.f32 %v277, 1.442695
    %v279 = vpow.pop %v278
    %v280 = vadd.f32 %v279, 1.0
    %v281 = vrcp.pop %v280
    %v282 = vmul.f32 %v280, %v281
    %v283 = vsub.f32 1.0, %v282
    %v284 = vmul.f32 %v281, %v283
    %v285 = vadd.f32 %v281, %v284
    %vm286 = vweird.f32 %v280
    %vm287 = vweird.f32 %v281
    %vm288 = vmor %vm286, %vm287
    %v289 = vsel %vm288, %v281, %v285
    %v290 = vand.u32 2147483647, %v280
    %vm291 = vcmp.eq.f32.partialorder %v290, 8.507059e+37
    %v292 = vand.u32 %v280, 2147483648
    %v293 = vor.u32 1.1754944e-38, %v292
    %v294 = vsel %vm291, %v293, %v289
    %v295 = vmul.f32 1.0, %v294
    %v296 = vmul.f32 %v295, %v249
    %v297 = vsub.f32 1.0, %v295
    %v298 = vmul.f32 %v297, %v195
    %v299 = vadd.f32 %v296, %v298
    %v300 = vld [vmem:[%s9] sm:$0xff]
    %v301 = vld [vmem:[%s9 + $0x8] sm:$0xff]
    %v302 = vld [vmem:[%s9 + $0x10] sm:$0xff]
    %v303 = vld [vmem:[%s9 + $0x18] sm:$0xff]
    %v304 = vld [vmem:[%s10] sm:$0x1]
    %v306 = vperm.slane %v304, 0
    %v309 = vsel %vm199, %v299, 0
    %311 = vmatpush.msra.mxu0 0.0
    %312 = vmatpush.msra.mxu0 0.0
    %313 = vmatpush.msra.mxu0 0.0
    %314 = vmatpush.msra.mxu0 0.0
    %315 = vmatpush.msra.mxu0 0.0
    %316 = vmatpush.msra.mxu0 0.0
    %317 = vmatpush.msra.mxu0 0.0
    %318 = vmatpush.msra.mxu0 0.0
    %319 = vmatpush.msra.mxu0 0.0
    %320 = vmatpush.msra.mxu0 0.0
    %321 = vmatpush.msra.mxu0 0.0
    %322 = vmatpush.msra.mxu0 0.0
    %323 = vmatpush.msra.mxu0 %v303
    %324 = vmatpush.msra.mxu0 %v302
    %325 = vmatpush.msra.mxu0 %v301
    %326 = vmatpush.msra.mxu0 %v300
    %327 = vmatmul.f32.gmra.mxu0 %v309
    %v328 = vpop.f32.mrf.mxu0
    %v329 = vadd.f32 %v306, %v328
    %330 = vdwg.mxu0
    %332 = vrot.lane.b32.xlu0 %v329, 120
    %v333 = vpop.permute.xlu0 %332
    %335 = vrot.lane.b32.xlu0 %v329, 112
    %v336 = vpop.permute.xlu0 %335
    %338 = vrot.lane.b32.xlu0 %v329, 104
    %v339 = vpop.permute.xlu0 %338
    %v341 = vrot.slane %v336, 4
    %vm342 = vcmask 1047556
    %v343 = vsel %vm342, %v341, %v329
    %v344 = vrot.slane %v329, 4
    %v345 = vsel %vm342, %v336, %v344
    %v347 = vunpack.c.l.s4 1983009808
    %v348 = vunpack.c.0.s8 %v347
    %v349 = vperm.slane %v343, %v348
    %v351 = vunpack.c.l.s4 1983009808
    %v352 = vunpack.c.0.s8 %v351
    %v353 = vperm.slane %v345, %v352
    %v354 = vrot.slane %v339, 4
    %v355 = vsel %vm342, %v354, %v333
    %v356 = vrot.slane %v333, 4
    %v357 = vsel %vm342, %v339, %v356
    %v359 = vunpack.c.l.s4 1983009808
    %v360 = vunpack.c.0.s8 %v359
    %v361 = vperm.slane %v355, %v360
    %v363 = vunpack.c.l.s4 1983009808
    %v364 = vunpack.c.0.s8 %v363
    %v365 = vperm.slane %v357, %v364
    %v366 = vrot.slane %v361, 4
    %v367 = vsel %vm342, %v366, %v349
    %v368 = vrot.slane %v349, 4
    %v369 = vsel %vm342, %v361, %v368
    %v371 = vunpack.c.l.s4 1934713408
    %v372 = vunpack.c.0.s8 %v371
    %v373 = vperm.slane %v367, %v372
    %v375 = vunpack.c.l.s4 1934713408
    %v376 = vunpack.c.0.s8 %v375
    %v377 = vperm.slane %v369, %v376
    %v378 = vrot.slane %v365, 4
    %v379 = vsel %vm342, %v378, %v353
    %v380 = vrot.slane %v353, 4
    %v381 = vsel %vm342, %v365, %v380
    %v383 = vunpack.c.l.s4 1934713408
    %v384 = vunpack.c.0.s8 %v383
    %v385 = vperm.slane %v379, %v384
    %v387 = vunpack.c.l.s4 1934713408
    %v388 = vunpack.c.0.s8 %v387
    %v389 = vperm.slane %v381, %v388
    %v390 = vrot.slane %v373, 4
    %v391 = vsel %vm342, 0.0, %v390
    %v392 = vrot.slane %v377, 4
    %v393 = vsel %vm342, 0.0, %v392
    %v394 = vrot.slane %v385, 4
    %v395 = vsel %vm342, 0.0, %v394
    %v396 = vrot.slane %v389, 4
    %v397 = vsel %vm342, 0.0, %v396
    %v398 = vsel %vm342, %v392, %v373
    %v400 = vunpack.c.l.s4 1983009808
    %v401 = vunpack.c.0.s8 %v400
    %v402 = vperm.slane %v398, %v401
    %v403 = vrot.slane %v393, 4
    %v404 = vsel %vm342, %v403, %v391
    %v406 = vunpack.c.l.s4 1983009808
    %v407 = vunpack.c.0.s8 %v406
    %v408 = vperm.slane %v404, %v407
    %v409 = vsel %vm342, %v396, %v385
    %v411 = vunpack.c.l.s4 1983009808
    %v412 = vunpack.c.0.s8 %v411
    %v413 = vperm.slane %v409, %v412
    %v414 = vrot.slane %v397, 4
    %v415 = vsel %vm342, %v414, %v395
    %v417 = vunpack.c.l.s4 1983009808
    %v418 = vunpack.c.0.s8 %v417
    %v419 = vperm.slane %v415, %v418
    %v420 = vrot.slane %v408, 4
    %v421 = vsel %vm342, %v420, %v402
    %v422 = vrot.slane %v402, 4
    %v423 = vsel %vm342, %v408, %v422
    %v425 = vunpack.c.l.s4 1934713408
    %v426 = vunpack.c.0.s8 %v425
    %v427 = vperm.slane %v421, %v426
    %v429 = vunpack.c.l.s4 1934713408
    %v430 = vunpack.c.0.s8 %v429
    %v431 = vperm.slane %v423, %v430
    %v432 = vrot.slane %v419, 4
    %v433 = vsel %vm342, %v432, %v413
    %v434 = vrot.slane %v413, 4
    %v435 = vsel %vm342, %v419, %v434
    %v437 = vunpack.c.l.s4 1934713408
    %v438 = vunpack.c.0.s8 %v437
    %v439 = vperm.slane %v433, %v438
    %v441 = vunpack.c.l.s4 1934713408
    %v442 = vunpack.c.0.s8 %v441
    %v443 = vperm.slane %v435, %v442
    %v444 = vrot.slane %v439, 4
    %v445 = vsel %vm342, %v444, %v427
    %v446 = vrot.slane %v427, 4
    %v447 = vsel %vm342, %v439, %v446
    %v448 = vrot.slane %v443, 4
    %v449 = vsel %vm342, %v448, %v431
    %v450 = vrot.slane %v431, 4
    %v451 = vsel %vm342, %v443, %v450
    %452 = vrot.lane.b32.xlu0 %v329, 96
    %v453 = vpop.permute.xlu0 %452
    %454 = vrot.lane.b32.xlu0 %v333, 96
    %v455 = vpop.permute.xlu0 %454
    %456 = vrot.lane.b32.xlu0 %v336, 96
    %v457 = vpop.permute.xlu0 %456
    %458 = vrot.lane.b32.xlu0 %v339, 96
    %v459 = vpop.permute.xlu0 %458
    %v464 = vrot.slane %v457, 4
    %v465 = vsel %vm342, %v464, %v453
    %v466 = vrot.slane %v453, 4
    %v467 = vsel %vm342, %v457, %v466
    %v469 = vunpack.c.l.s4 1983009808
    %v470 = vunpack.c.0.s8 %v469
    %v471 = vperm.slane %v465, %v470
    %v473 = vunpack.c.l.s4 1983009808
    %v474 = vunpack.c.0.s8 %v473
    %v475 = vperm.slane %v467, %v474
    %v476 = vrot.slane %v459, 4
    %v477 = vsel %vm342, %v476, %v455
    %v478 = vrot.slane %v455, 4
    %v479 = vsel %vm342, %v459, %v478
    %v481 = vunpack.c.l.s4 1983009808
    %v482 = vunpack.c.0.s8 %v481
    %v483 = vperm.slane %v477, %v482
    %v485 = vunpack.c.l.s4 1983009808
    %v486 = vunpack.c.0.s8 %v485
    %v487 = vperm.slane %v479, %v486
    %v488 = vrot.slane %v483, 4
    %v489 = vsel %vm342, %v488, %v471
    %v490 = vrot.slane %v471, 4
    %v491 = vsel %vm342, %v483, %v490
    %v493 = vunpack.c.l.s4 1934713408
    %v494 = vunpack.c.0.s8 %v493
    %v495 = vperm.slane %v489, %v494
    %v497 = vunpack.c.l.s4 1934713408
    %v498 = vunpack.c.0.s8 %v497
    %v499 = vperm.slane %v491, %v498
    %v500 = vrot.slane %v487, 4
    %v501 = vsel %vm342, %v500, %v475
    %v502 = vrot.slane %v475, 4
    %v503 = vsel %vm342, %v487, %v502
    %v505 = vunpack.c.l.s4 1934713408
    %v506 = vunpack.c.0.s8 %v505
    %v507 = vperm.slane %v501, %v506
    %v509 = vunpack.c.l.s4 1934713408
    %v510 = vunpack.c.0.s8 %v509
    %v511 = vperm.slane %v503, %v510
    %v512 = vrot.slane %v495, 4
    %v513 = vsel %vm342, 0.0, %v512
    %v514 = vrot.slane %v499, 4
    %v515 = vsel %vm342, 0.0, %v514
    %v516 = vrot.slane %v507, 4
    %v517 = vsel %vm342, 0.0, %v516
    %v518 = vrot.slane %v511, 4
    %v519 = vsel %vm342, 0.0, %v518
    %v520 = vsel %vm342, %v514, %v495
    %v522 = vunpack.c.l.s4 1983009808
    %v523 = vunpack.c.0.s8 %v522
    %v524 = vperm.slane %v520, %v523
    %v525 = vrot.slane %v515, 4
    %v526 = vsel %vm342, %v525, %v513
    %v528 = vunpack.c.l.s4 1983009808
    %v529 = vunpack.c.0.s8 %v528
    %v530 = vperm.slane %v526, %v529
    %v531 = vsel %vm342, %v518, %v507
    %v533 = vunpack.c.l.s4 1983009808
    %v534 = vunpack.c.0.s8 %v533
    %v535 = vperm.slane %v531, %v534
    %v536 = vrot.slane %v519, 4
    %v537 = vsel %vm342, %v536, %v517
    %v539 = vunpack.c.l.s4 1983009808
    %v540 = vunpack.c.0.s8 %v539
    %v541 = vperm.slane %v537, %v540
    %v542 = vrot.slane %v530, 4
    %v543 = vsel %vm342, %v542, %v524
    %v544 = vrot.slane %v524, 4
    %v545 = vsel %vm342, %v530, %v544
    %v547 = vunpack.c.l.s4 1934713408
    %v548 = vunpack.c.0.s8 %v547
    %v549 = vperm.slane %v543, %v548
    %v551 = vunpack.c.l.s4 1934713408
    %v552 = vunpack.c.0.s8 %v551
    %v553 = vperm.slane %v545, %v552
    %v554 = vrot.slane %v541, 4
    %v555 = vsel %vm342, %v554, %v535
    %v556 = vrot.slane %v535, 4
    %v557 = vsel %vm342, %v541, %v556
    %v559 = vunpack.c.l.s4 1934713408
    %v560 = vunpack.c.0.s8 %v559
    %v561 = vperm.slane %v555, %v560
    %v563 = vunpack.c.l.s4 1934713408
    %v564 = vunpack.c.0.s8 %v563
    %v565 = vperm.slane %v557, %v564
    %v566 = vrot.slane %v561, 4
    %v567 = vsel %vm342, %v566, %v549
    %v568 = vrot.slane %v549, 4
    %v569 = vsel %vm342, %v561, %v568
    %v570 = vrot.slane %v565, 4
    %v571 = vsel %vm342, %v570, %v553
    %v572 = vrot.slane %v553, 4
    %v573 = vsel %vm342, %v565, %v572
    %574 = vrot.lane.b32.xlu0 %v329, 64
    %v575 = vpop.permute.xlu0 %574
    %576 = vrot.lane.b32.xlu0 %v333, 64
    %v577 = vpop.permute.xlu0 %576
    %578 = vrot.lane.b32.xlu0 %v336, 64
    %v579 = vpop.permute.xlu0 %578
    %580 = vrot.lane.b32.xlu0 %v339, 64
    %v581 = vpop.permute.xlu0 %580
    %v586 = vrot.slane %v579, 4
    %v587 = vsel %vm342, %v586, %v575
    %v588 = vrot.slane %v575, 4
    %v589 = vsel %vm342, %v579, %v588
    %v591 = vunpack.c.l.s4 1983009808
    %v592 = vunpack.c.0.s8 %v591
    %v593 = vperm.slane %v587, %v592
    %v595 = vunpack.c.l.s4 1983009808
    %v596 = vunpack.c.0.s8 %v595
    %v597 = vperm.slane %v589, %v596
    %v598 = vrot.slane %v581, 4
    %v599 = vsel %vm342, %v598, %v577
    %v600 = vrot.slane %v577, 4
    %v601 = vsel %vm342, %v581, %v600
    %v603 = vunpack.c.l.s4 1983009808
    %v604 = vunpack.c.0.s8 %v603
    %v605 = vperm.slane %v599, %v604
    %v607 = vunpack.c.l.s4 1983009808
    %v608 = vunpack.c.0.s8 %v607
    %v609 = vperm.slane %v601, %v608
    %v610 = vrot.slane %v605, 4
    %v611 = vsel %vm342, %v610, %v593
    %v612 = vrot.slane %v593, 4
    %v613 = vsel %vm342, %v605, %v612
    %v615 = vunpack.c.l.s4 1934713408
    %v616 = vunpack.c.0.s8 %v615
    %v617 = vperm.slane %v611, %v616
    %v619 = vunpack.c.l.s4 1934713408
    %v620 = vunpack.c.0.s8 %v619
    %v621 = vperm.slane %v613, %v620
    %v622 = vrot.slane %v609, 4
    %v623 = vsel %vm342, %v622, %v597
    %v624 = vrot.slane %v597, 4
    %v625 = vsel %vm342, %v609, %v624
    %v627 = vunpack.c.l.s4 1934713408
    %v628 = vunpack.c.0.s8 %v627
    %v629 = vperm.slane %v623, %v628
    %v631 = vunpack.c.l.s4 1934713408
    %v632 = vunpack.c.0.s8 %v631
    %v633 = vperm.slane %v625, %v632
    %v634 = vrot.slane %v617, 4
    %v635 = vsel %vm342, 0.0, %v634
    %v636 = vrot.slane %v621, 4
    %v637 = vsel %vm342, 0.0, %v636
    %v638 = vrot.slane %v629, 4
    %v639 = vsel %vm342, 0.0, %v638
    %v640 = vrot.slane %v633, 4
    %v641 = vsel %vm342, 0.0, %v640
    %v642 = vsel %vm342, %v636, %v617
    %v644 = vunpack.c.l.s4 1983009808
    %v645 = vunpack.c.0.s8 %v644
    %v646 = vperm.slane %v642, %v645
    %v647 = vrot.slane %v637, 4
    %v648 = vsel %vm342, %v647, %v635
    %v650 = vunpack.c.l.s4 1983009808
    %v651 = vunpack.c.0.s8 %v650
    %v652 = vperm.slane %v648, %v651
    %v653 = vsel %vm342, %v640, %v629
    %v655 = vunpack.c.l.s4 1983009808
    %v656 = vunpack.c.0.s8 %v655
    %v657 = vperm.slane %v653, %v656
    %v658 = vrot.slane %v641, 4
    %v659 = vsel %vm342, %v658, %v639
    %v661 = vunpack.c.l.s4 1983009808
    %v662 = vunpack.c.0.s8 %v661
    %v663 = vperm.slane %v659, %v662
    %v664 = vrot.slane %v652, 4
    %v665 = vsel %vm342, %v664, %v646
    %v666 = vrot.slane %v646, 4
    %v667 = vsel %vm342, %v652, %v666
    %v669 = vunpack.c.l.s4 1934713408
    %v670 = vunpack.c.0.s8 %v669
    %v671 = vperm.slane %v665, %v670
    %v673 = vunpack.c.l.s4 1934713408
    %v674 = vunpack.c.0.s8 %v673
    %v675 = vperm.slane %v667, %v674
    %v676 = vrot.slane %v663, 4
    %v677 = vsel %vm342, %v676, %v657
    %v678 = vrot.slane %v657, 4
    %v679 = vsel %vm342, %v663, %v678
    %v681 = vunpack.c.l.s4 1934713408
    %v682 = vunpack.c.0.s8 %v681
    %v683 = vperm.slane %v677, %v682
    %v685 = vunpack.c.l.s4 1934713408
    %v686 = vunpack.c.0.s8 %v685
    %v687 = vperm.slane %v679, %v686
    %v688 = vrot.slane %v683, 4
    %v689 = vsel %vm342, %v688, %v671
    %v690 = vrot.slane %v671, 4
    %v691 = vsel %vm342, %v683, %v690
    %v692 = vrot.slane %v687, 4
    %v693 = vsel %vm342, %v692, %v675
    %v694 = vrot.slane %v675, 4
    %v695 = vsel %vm342, %v687, %v694
    %vm696 = vcmask 64512
    %v698 = vsel %vm696, %v445, 0
    %v701 = vsel %vm696, %v567, 0
    %703 = vmatpush.xpose.msra.mxu0 0.0
    %704 = vmatpush.xpose.msra.mxu0 0.0
    %705 = vmatpush.xpose.msra.mxu0 0.0
    %706 = vmatpush.xpose.msra.mxu0 0.0
    %707 = vmatpush.xpose.msra.mxu0 0.0
    %708 = vmatpush.xpose.msra.mxu0 0.0
    %709 = vmatpush.xpose.msra.mxu0 0.0
    %710 = vmatpush.xpose.msra.mxu0 0.0
    %711 = vmatpush.xpose.msra.mxu0 0.0
    %712 = vmatpush.xpose.msra.mxu0 0.0
    %713 = vmatpush.xpose.msra.mxu0 0.0
    %714 = vmatpush.xpose.msra.mxu0 0.0
    %715 = vmatpush.xpose.msra.mxu0 0.0
    %716 = vmatpush.xpose.msra.mxu0 0.0
    %717 = vmatpush.xpose.msra.mxu0 0.0
    %718 = vmatpush.xpose.msra.mxu0 %v701
    %719 = vmatmul.f32.gmra.mxu0 %v698
    %v720 = vpop.f32.mrf.mxu0
    %v721 = vadd.f32 0.0, %v720
    %722 = vdwg.mxu0
    %v724 = vsel %vm696, %v447, 0
    %v727 = vsel %vm696, %v569, 0
    %729 = vmatpush.xpose.msra.mxu0 0.0
    %730 = vmatpush.xpose.msra.mxu0 0.0
    %731 = vmatpush.xpose.msra.mxu0 0.0
    %732 = vmatpush.xpose.msra.mxu0 0.0
    %733 = vmatpush.xpose.msra.mxu0 0.0
    %734 = vmatpush.xpose.msra.mxu0 0.0
    %735 = vmatpush.xpose.msra.mxu0 0.0
    %736 = vmatpush.xpose.msra.mxu0 0.0
    %737 = vmatpush.xpose.msra.mxu0 0.0
    %738 = vmatpush.xpose.msra.mxu0 0.0
    %739 = vmatpush.xpose.msra.mxu0 0.0
    %740 = vmatpush.xpose.msra.mxu0 0.0
    %741 = vmatpush.xpose.msra.mxu0 0.0
    %742 = vmatpush.xpose.msra.mxu0 0.0
    %743 = vmatpush.xpose.msra.mxu0 0.0
    %744 = vmatpush.xpose.msra.mxu0 %v727
    %745 = vmatmul.f32.gmra.mxu0 %v724
    %v746 = vpop.f32.mrf.mxu0
    %v747 = vadd.f32 0.0, %v746
    %748 = vdwg.mxu0
    %v750 = vsel %vm696, %v449, 0
    %v753 = vsel %vm696, %v571, 0
    %755 = vmatpush.xpose.msra.mxu0 0.0
    %756 = vmatpush.xpose.msra.mxu0 0.0
    %757 = vmatpush.xpose.msra.mxu0 0.0
    %758 = vmatpush.xpose.msra.mxu0 0.0
    %759 = vmatpush.xpose.msra.mxu0 0.0
    %760 = vmatpush.xpose.msra.mxu0 0.0
    %761 = vmatpush.xpose.msra.mxu0 0.0
    %762 = vmatpush.xpose.msra.mxu0 0.0
    %763 = vmatpush.xpose.msra.mxu0 0.0
    %764 = vmatpush.xpose.msra.mxu0 0.0
    %765 = vmatpush.xpose.msra.mxu0 0.0
    %766 = vmatpush.xpose.msra.mxu0 0.0
    %767 = vmatpush.xpose.msra.mxu0 0.0
    %768 = vmatpush.xpose.msra.mxu0 0.0
    %769 = vmatpush.xpose.msra.mxu0 0.0
    %770 = vmatpush.xpose.msra.mxu0 %v753
    %771 = vmatmul.f32.gmra.mxu0 %v750
    %v772 = vpop.f32.mrf.mxu0
    %v773 = vadd.f32 0.0, %v772
    %774 = vdwg.mxu0
    %v776 = vsel %vm696, %v451, 0
    %v779 = vsel %vm696, %v573, 0
    %781 = vmatpush.xpose.msra.mxu0 0.0
    %782 = vmatpush.xpose.msra.mxu0 0.0
    %783 = vmatpush.xpose.msra.mxu0 0.0
    %784 = vmatpush.xpose.msra.mxu0 0.0
    %785 = vmatpush.xpose.msra.mxu0 0.0
    %786 = vmatpush.xpose.msra.mxu0 0.0
    %787 = vmatpush.xpose.msra.mxu0 0.0
    %788 = vmatpush.xpose.msra.mxu0 0.0
    %789 = vmatpush.xpose.msra.mxu0 0.0
    %790 = vmatpush.xpose.msra.mxu0 0.0
    %791 = vmatpush.xpose.msra.mxu0 0.0
    %792 = vmatpush.xpose.msra.mxu0 0.0
    %793 = vmatpush.xpose.msra.mxu0 0.0
    %794 = vmatpush.xpose.msra.mxu0 0.0
    %795 = vmatpush.xpose.msra.mxu0 0.0
    %796 = vmatpush.xpose.msra.mxu0 %v779
    %797 = vmatmul.f32.gmra.mxu0 %v776
    %v798 = vpop.f32.mrf.mxu0
    %v799 = vadd.f32 0.0, %v798
    %800 = vdwg.mxu0
    %v801 = vsel %vm696, %v721, -inf
    %802 = vmax.xlane.f32.xlu0 %v801
    %v803 = vpop.xlane.xlu0 %802
    %v804 = vsel %vm696, %v747, -inf
    %805 = vmax.xlane.f32.xlu0 %v804
    %v806 = vpop.xlane.xlu0 %805
    %v807 = vsel %vm696, %v773, -inf
    %808 = vmax.xlane.f32.xlu0 %v807
    %v809 = vpop.xlane.xlu0 %808
    %v810 = vsel %vm696, %v799, -inf
    %811 = vmax.xlane.f32.xlu0 %v810
    %v812 = vpop.xlane.xlu0 %811
    %v813 = vsub.f32 %v721, %v803
    %v814 = vsub.f32 %v747, %v806
    %v815 = vsub.f32 %v773, %v809
    %v816 = vsub.f32 %v799, %v812
    %v817 = vmul.f32 %v813, 1.442695
    %v818 = vpow.pop %v817
    %v819 = vmul.f32 %v814, 1.442695
    %v820 = vpow.pop %v819
    %v821 = vmul.f32 %v815, 1.442695
    %v822 = vpow.pop %v821
    %v823 = vmul.f32 %v816, 1.442695
    %v824 = vpow.pop %v823
    %v825 = vsel %vm696, %v818, 0.0
    %826 = vadd.xlane.f32.xlu0 %v825
    %v827 = vpop.xlane.xlu0 %826
    %v828 = vsel %vm696, %v820, 0.0
    %829 = vadd.xlane.f32.xlu0 %v828
    %v830 = vpop.xlane.xlu0 %829
    %v831 = vsel %vm696, %v822, 0.0
    %832 = vadd.xlane.f32.xlu0 %v831
    %v833 = vpop.xlane.xlu0 %832
    %v834 = vsel %vm696, %v824, 0.0
    %835 = vadd.xlane.f32.xlu0 %v834
    %v836 = vpop.xlane.xlu0 %835
    %837 = vxpose.xlu0.b32.start [1/16] %v689, 128
    %838 = vxpose.xlu0.b32.cont [2/16] 0.0, 128
    %839 = vxpose.xlu0.b32.cont [3/16] 0.0, 128
    %840 = vxpose.xlu0.b32.cont [4/16] 0.0, 128
    %841 = vxpose.xlu0.b32.cont [5/16] 0.0, 128
    %842 = vxpose.xlu0.b32.cont [6/16] 0.0, 128
    %843 = vxpose.xlu0.b32.cont [7/16] 0.0, 128
    %844 = vxpose.xlu0.b32.cont [8/16] 0.0, 128
    %845 = vxpose.xlu0.b32.cont [9/16] 0.0, 128
    %846 = vxpose.xlu0.b32.cont [10/16] 0.0, 128
    %847 = vxpose.xlu0.b32.cont [11/16] 0.0, 128
    %848 = vxpose.xlu0.b32.cont [12/16] 0.0, 128
    %849 = vxpose.xlu0.b32.cont [13/16] 0.0, 128
    %850 = vxpose.xlu0.b32.cont [14/16] 0.0, 128
    %851 = vxpose.xlu0.b32.cont [15/16] 0.0, 128
    %852 = vxpose.xlu0.b32.end [16/16] 0.0, 128
    %v853 = vpop.trf.xlu0
    %v854 = vpop.trf.xlu0
    %v855 = vpop.trf.xlu0
    %v856 = vpop.trf.xlu0
    %v857 = vpop.trf.xlu0
    %v858 = vpop.trf.xlu0
    %v859 = vpop.trf.xlu0
    %v860 = vpop.trf.xlu0
    %v861 = vpop.trf.xlu0
    %v862 = vpop.trf.xlu0
    %v863 = vpop.trf.xlu0
    %v864 = vpop.trf.xlu0
    %v865 = vpop.trf.xlu0
    %v866 = vpop.trf.xlu0
    %v867 = vpop.trf.xlu0
    %v868 = vpop.trf.xlu0
    %v870 = vsel %vm696, %v853, 0
    %v873 = vsel %vm696, %v818, 0
    %875 = vmatpush.xpose.msra.mxu0 0.0
    %876 = vmatpush.xpose.msra.mxu0 0.0
    %877 = vmatpush.xpose.msra.mxu0 0.0
    %878 = vmatpush.xpose.msra.mxu0 0.0
    %879 = vmatpush.xpose.msra.mxu0 0.0
    %880 = vmatpush.xpose.msra.mxu0 0.0
    %881 = vmatpush.xpose.msra.mxu0 0.0
    %882 = vmatpush.xpose.msra.mxu0 0.0
    %883 = vmatpush.xpose.msra.mxu0 0.0
    %884 = vmatpush.xpose.msra.mxu0 0.0
    %885 = vmatpush.xpose.msra.mxu0 0.0
    %886 = vmatpush.xpose.msra.mxu0 0.0
    %887 = vmatpush.xpose.msra.mxu0 0.0
    %888 = vmatpush.xpose.msra.mxu0 0.0
    %889 = vmatpush.xpose.msra.mxu0 0.0
    %890 = vmatpush.xpose.msra.mxu0 %v873
    %891 = vmatmul.f32.gmra.mxu0 %v870
    %v892 = vpop.f32.mrf.mxu0
    %v893 = vadd.f32 0.0, %v892
    %894 = vdwg.mxu0
    %895 = vxpose.xlu0.b32.start [1/16] %v691, 128
    %896 = vxpose.xlu0.b32.cont [2/16] 0.0, 128
    %897 = vxpose.xlu0.b32.cont [3/16] 0.0, 128
    %898 = vxpose.xlu0.b32.cont [4/16] 0.0, 128
    %899 = vxpose.xlu0.b32.cont [5/16] 0.0, 128
    %900 = vxpose.xlu0.b32.cont [6/16] 0.0, 128
    %901 = vxpose.xlu0.b32.cont [7/16] 0.0, 128
    %902 = vxpose.xlu0.b32.cont [8/16] 0.0, 128
    %903 = vxpose.xlu0.b32.cont [9/16] 0.0, 128
    %904 = vxpose.xlu0.b32.cont [10/16] 0.0, 128
    %905 = vxpose.xlu0.b32.cont [11/16] 0.0, 128
    %906 = vxpose.xlu0.b32.cont [12/16] 0.0, 128
    %907 = vxpose.xlu0.b32.cont [13/16] 0.0, 128
    %908 = vxpose.xlu0.b32.cont [14/16] 0.0, 128
    %909 = vxpose.xlu0.b32.cont [15/16] 0.0, 128
    %910 = vxpose.xlu0.b32.end [16/16] 0.0, 128
    %v911 = vpop.trf.xlu0
    %v912 = vpop.trf.xlu0
    %v913 = vpop.trf.xlu0
    %v914 = vpop.trf.xlu0
    %v915 = vpop.trf.xlu0
    %v916 = vpop.trf.xlu0
    %v917 = vpop.trf.xlu0
    %v918 = vpop.trf.xlu0
    %v919 = vpop.trf.xlu0
    %v920 = vpop.trf.xlu0
    %v921 = vpop.trf.xlu0
    %v922 = vpop.trf.xlu0
    %v923 = vpop.trf.xlu0
    %v924 = vpop.trf.xlu0
    %v925 = vpop.trf.xlu0
    %v926 = vpop.trf.xlu0
    %v928 = vsel %vm696, %v911, 0
    %v931 = vsel %vm696, %v820, 0
    %933 = vmatpush.xpose.msra.mxu0 0.0
    %934 = vmatpush.xpose.msra.mxu0 0.0
    %935 = vmatpush.xpose.msra.mxu0 0.0
    %936 = vmatpush.xpose.msra.mxu0 0.0
    %937 = vmatpush.xpose.msra.mxu0 0.0
    %938 = vmatpush.xpose.msra.mxu0 0.0
    %939 = vmatpush.xpose.msra.mxu0 0.0
    %940 = vmatpush.xpose.msra.mxu0 0.0
    %941 = vmatpush.xpose.msra.mxu0 0.0
    %942 = vmatpush.xpose.msra.mxu0 0.0
    %943 = vmatpush.xpose.msra.mxu0 0.0
    %944 = vmatpush.xpose.msra.mxu0 0.0
    %945 = vmatpush.xpose.msra.mxu0 0.0
    %946 = vmatpush.xpose.msra.mxu0 0.0
    %947 = vmatpush.xpose.msra.mxu0 0.0
    %948 = vmatpush.xpose.msra.mxu0 %v931
    %949 = vmatmul.f32.gmra.mxu0 %v928
    %v950 = vpop.f32.mrf.mxu0
    %v951 = vadd.f32 0.0, %v950
    %952 = vdwg.mxu0
    %953 = vxpose.xlu0.b32.start [1/16] %v693, 128
    %954 = vxpose.xlu0.b32.cont [2/16] 0.0, 128
    %955 = vxpose.xlu0.b32.cont [3/16] 0.0, 128
    %956 = vxpose.xlu0.b32.cont [4/16] 0.0, 128
    %957 = vxpose.xlu0.b32.cont [5/16] 0.0, 128
    %958 = vxpose.xlu0.b32.cont [6/16] 0.0, 128
    %959 = vxpose.xlu0.b32.cont [7/16] 0.0, 128
    %960 = vxpose.xlu0.b32.cont [8/16] 0.0, 128
    %961 = vxpose.xlu0.b32.cont [9/16] 0.0, 128
    %962 = vxpose.xlu0.b32.cont [10/16] 0.0, 128
    %963 = vxpose.xlu0.b32.cont [11/16] 0.0, 128
    %964 = vxpose.xlu0.b32.cont [12/16] 0.0, 128
    %965 = vxpose.xlu0.b32.cont [13/16] 0.0, 128
    %966 = vxpose.xlu0.b32.cont [14/16] 0.0, 128
    %967 = vxpose.xlu0.b32.cont [15/16] 0.0, 128
    %968 = vxpose.xlu0.b32.end [16/16] 0.0, 128
    %v969 = vpop.trf.xlu0
    %v970 = vpop.trf.xlu0
    %v971 = vpop.trf.xlu0
    %v972 = vpop.trf.xlu0
    %v973 = vpop.trf.xlu0
    %v974 = vpop.trf.xlu0
    %v975 = vpop.trf.xlu0
    %v976 = vpop.trf.xlu0
    %v977 = vpop.trf.xlu0
    %v978 = vpop.trf.xlu0
    %v979 = vpop.trf.xlu0
    %v980 = vpop.trf.xlu0
    %v981 = vpop.trf.xlu0
    %v982 = vpop.trf.xlu0
    %v983 = vpop.trf.xlu0
    %v984 = vpop.trf.xlu0
    %v986 = vsel %vm696, %v969, 0
    %v989 = vsel %vm696, %v822, 0
    %991 = vmatpush.xpose.msra.mxu0 0.0
    %992 = vmatpush.xpose.msra.mxu0 0.0
    %993 = vmatpush.xpose.msra.mxu0 0.0
    %994 = vmatpush.xpose.msra.mxu0 0.0
    %995 = vmatpush.xpose.msra.mxu0 0.0
    %996 = vmatpush.xpose.msra.mxu0 0.0
    %997 = vmatpush.xpose.msra.mxu0 0.0
    %998 = vmatpush.xpose.msra.mxu0 0.0
    %999 = vmatpush.xpose.msra.mxu0 0.0
    %1000 = vmatpush.xpose.msra.mxu0 0.0
    %1001 = vmatpush.xpose.msra.mxu0 0.0
    %1002 = vmatpush.xpose.msra.mxu0 0.0
    %1003 = vmatpush.xpose.msra.mxu0 0.0
    %1004 = vmatpush.xpose.msra.mxu0 0.0
    %1005 = vmatpush.xpose.msra.mxu0 0.0
    %1006 = vmatpush.xpose.msra.mxu0 %v989
    %1007 = vmatmul.f32.gmra.mxu0 %v986
    %v1008 = vpop.f32.mrf.mxu0
    %v1009 = vadd.f32 0.0, %v1008
    %1010 = vdwg.mxu0
    %1011 = vxpose.xlu0.b32.start [1/16] %v695, 128
    %1012 = vxpose.xlu0.b32.cont [2/16] 0.0, 128
    %1013 = vxpose.xlu0.b32.cont [3/16] 0.0, 128
    %1014 = vxpose.xlu0.b32.cont [4/16] 0.0, 128
    %1015 = vxpose.xlu0.b32.cont [5/16] 0.0, 128
    %1016 = vxpose.xlu0.b32.cont [6/16] 0.0, 128
    %1017 = vxpose.xlu0.b32.cont [7/16] 0.0, 128
    %1018 = vxpose.xlu0.b32.cont [8/16] 0.0, 128
    %1019 = vxpose.xlu0.b32.cont [9/16] 0.0, 128
    %1020 = vxpose.xlu0.b32.cont [10/16] 0.0, 128
    %1021 = vxpose.xlu0.b32.cont [11/16] 0.0, 128
    %1022 = vxpose.xlu0.b32.cont [12/16] 0.0, 128
    %1023 = vxpose.xlu0.b32.cont [13/16] 0.0, 128
    %1024 = vxpose.xlu0.b32.cont [14/16] 0.0, 128
    %1025 = vxpose.xlu0.b32.cont [15/16] 0.0, 128
    %1026 = vxpose.xlu0.b32.end [16/16] 0.0, 128
    %v1027 = vpop.trf.xlu0
    %v1028 = vpop.trf.xlu0
    %v1029 = vpop.trf.xlu0
    %v1030 = vpop.trf.xlu0
    %v1031 = vpop.trf.xlu0
    %v1032 = vpop.trf.xlu0
    %v1033 = vpop.trf.xlu0
    %v1034 = vpop.trf.xlu0
    %v1035 = vpop.trf.xlu0
    %v1036 = vpop.trf.xlu0
    %v1037 = vpop.trf.xlu0
    %v1038 = vpop.trf.xlu0
    %v1039 = vpop.trf.xlu0
    %v1040 = vpop.trf.xlu0
    %v1041 = vpop.trf.xlu0
    %v1042 = vpop.trf.xlu0
    %v1044 = vsel %vm696, %v1027, 0
    %v1047 = vsel %vm696, %v824, 0
    %1049 = vmatpush.xpose.msra.mxu0 0.0
    %1050 = vmatpush.xpose.msra.mxu0 0.0
    %1051 = vmatpush.xpose.msra.mxu0 0.0
    %1052 = vmatpush.xpose.msra.mxu0 0.0
    %1053 = vmatpush.xpose.msra.mxu0 0.0
    %1054 = vmatpush.xpose.msra.mxu0 0.0
    %1055 = vmatpush.xpose.msra.mxu0 0.0
    %1056 = vmatpush.xpose.msra.mxu0 0.0
    %1057 = vmatpush.xpose.msra.mxu0 0.0
    %1058 = vmatpush.xpose.msra.mxu0 0.0
    %1059 = vmatpush.xpose.msra.mxu0 0.0
    %1060 = vmatpush.xpose.msra.mxu0 0.0
    %1061 = vmatpush.xpose.msra.mxu0 0.0
    %1062 = vmatpush.xpose.msra.mxu0 0.0
    %1063 = vmatpush.xpose.msra.mxu0 0.0
    %1064 = vmatpush.xpose.msra.mxu0 %v1047
    %1065 = vmatmul.f32.gmra.mxu0 %v1044
    %v1066 = vpop.f32.mrf.mxu0
    %v1067 = vadd.f32 0.0, %v1066
    %1068 = vdwg.mxu0
    %1069 = vxpose.xlu0.b32.start [1/16] %v893, 128
    %1070 = vxpose.xlu0.b32.cont [2/16] 0.0, 128
    %1071 = vxpose.xlu0.b32.cont [3/16] 0.0, 128
    %1072 = vxpose.xlu0.b32.cont [4/16] 0.0, 128
    %1073 = vxpose.xlu0.b32.cont [5/16] 0.0, 128
    %1074 = vxpose.xlu0.b32.cont [6/16] 0.0, 128
    %1075 = vxpose.xlu0.b32.cont [7/16] 0.0, 128
    %1076 = vxpose.xlu0.b32.cont [8/16] 0.0, 128
    %1077 = vxpose.xlu0.b32.cont [9/16] 0.0, 128
    %1078 = vxpose.xlu0.b32.cont [10/16] 0.0, 128
    %1079 = vxpose.xlu0.b32.cont [11/16] 0.0, 128
    %1080 = vxpose.xlu0.b32.cont [12/16] 0.0, 128
    %1081 = vxpose.xlu0.b32.cont [13/16] 0.0, 128
    %1082 = vxpose.xlu0.b32.cont [14/16] 0.0, 128
    %1083 = vxpose.xlu0.b32.cont [15/16] 0.0, 128
    %1084 = vxpose.xlu0.b32.end [16/16] 0.0, 128
    %v1085 = vpop.trf.xlu0
    %v1086 = vpop.trf.xlu0
    %v1087 = vpop.trf.xlu0
    %v1088 = vpop.trf.xlu0
    %v1089 = vpop.trf.xlu0
    %v1090 = vpop.trf.xlu0
    %v1091 = vpop.trf.xlu0
    %v1092 = vpop.trf.xlu0
    %v1093 = vpop.trf.xlu0
    %v1094 = vpop.trf.xlu0
    %v1095 = vpop.trf.xlu0
    %v1096 = vpop.trf.xlu0
    %v1097 = vpop.trf.xlu0
    %v1098 = vpop.trf.xlu0
    %v1099 = vpop.trf.xlu0
    %v1100 = vpop.trf.xlu0
    %1101 = vxpose.xlu0.b32.start [1/16] %v951, 128
    %1102 = vxpose.xlu0.b32.cont [2/16] 0.0, 128
    %1103 = vxpose.xlu0.b32.cont [3/16] 0.0, 128
    %1104 = vxpose.xlu0.b32.cont [4/16] 0.0, 128
    %1105 = vxpose.xlu0.b32.cont [5/16] 0.0, 128
    %1106 = vxpose.xlu0.b32.cont [6/16] 0.0, 128
    %1107 = vxpose.xlu0.b32.cont [7/16] 0.0, 128
    %1108 = vxpose.xlu0.b32.cont [8/16] 0.0, 128
    %1109 = vxpose.xlu0.b32.cont [9/16] 0.0, 128
    %1110 = vxpose.xlu0.b32.cont [10/16] 0.0, 128
    %1111 = vxpose.xlu0.b32.cont [11/16] 0.0, 128
    %1112 = vxpose.xlu0.b32.cont [12/16] 0.0, 128
    %1113 = vxpose.xlu0.b32.cont [13/16] 0.0, 128
    %1114 = vxpose.xlu0.b32.cont [14/16] 0.0, 128
    %1115 = vxpose.xlu0.b32.cont [15/16] 0.0, 128
    %1116 = vxpose.xlu0.b32.end [16/16] 0.0, 128
    %v1117 = vpop.trf.xlu0
    %v1118 = vpop.trf.xlu0
    %v1119 = vpop.trf.xlu0
    %v1120 = vpop.trf.xlu0
    %v1121 = vpop.trf.xlu0
    %v1122 = vpop.trf.xlu0
    %v1123 = vpop.trf.xlu0
    %v1124 = vpop.trf.xlu0
    %v1125 = vpop.trf.xlu0
    %v1126 = vpop.trf.xlu0
    %v1127 = vpop.trf.xlu0
    %v1128 = vpop.trf.xlu0
    %v1129 = vpop.trf.xlu0
    %v1130 = vpop.trf.xlu0
    %v1131 = vpop.trf.xlu0
    %v1132 = vpop.trf.xlu0
    %1133 = vxpose.xlu0.b32.start [1/16] %v1009, 128
    %1134 = vxpose.xlu0.b32.cont [2/16] 0.0, 128
    %1135 = vxpose.xlu0.b32.cont [3/16] 0.0, 128
    %1136 = vxpose.xlu0.b32.cont [4/16] 0.0, 128
    %1137 = vxpose.xlu0.b32.cont [5/16] 0.0, 128
    %1138 = vxpose.xlu0.b32.cont [6/16] 0.0, 128
    %1139 = vxpose.xlu0.b32.cont [7/16] 0.0, 128
    %1140 = vxpose.xlu0.b32.cont [8/16] 0.0, 128
    %1141 = vxpose.xlu0.b32.cont [9/16] 0.0, 128
    %1142 = vxpose.xlu0.b32.cont [10/16] 0.0, 128
    %1143 = vxpose.xlu0.b32.cont [11/16] 0.0, 128
    %1144 = vxpose.xlu0.b32.cont [12/16] 0.0, 128
    %1145 = vxpose.xlu0.b32.cont [13/16] 0.0, 128
    %1146 = vxpose.xlu0.b32.cont [14/16] 0.0, 128
    %1147 = vxpose.xlu0.b32.cont [15/16] 0.0, 128
    %1148 = vxpose.xlu0.b32.end [16/16] 0.0, 128
    %v1149 = vpop.trf.xlu0
    %v1150 = vpop.trf.xlu0
    %v1151 = vpop.trf.xlu0
    %v1152 = vpop.trf.xlu0
    %v1153 = vpop.trf.xlu0
    %v1154 = vpop.trf.xlu0
    %v1155 = vpop.trf.xlu0
    %v1156 = vpop.trf.xlu0
    %v1157 = vpop.trf.xlu0
    %v1158 = vpop.trf.xlu0
    %v1159 = vpop.trf.xlu0
    %v1160 = vpop.trf.xlu0
    %v1161 = vpop.trf.xlu0
    %v1162 = vpop.trf.xlu0
    %v1163 = vpop.trf.xlu0
    %v1164 = vpop.trf.xlu0
    %1165 = vxpose.xlu0.b32.start [1/16] %v1067, 128
    %1166 = vxpose.xlu0.b32.cont [2/16] 0.0, 128
    %1167 = vxpose.xlu0.b32.cont [3/16] 0.0, 128
    %1168 = vxpose.xlu0.b32.cont [4/16] 0.0, 128
    %1169 = vxpose.xlu0.b32.cont [5/16] 0.0, 128
    %1170 = vxpose.xlu0.b32.cont [6/16] 0.0, 128
    %1171 = vxpose.xlu0.b32.cont [7/16] 0.0, 128
    %1172 = vxpose.xlu0.b32.cont [8/16] 0.0, 128
    %1173 = vxpose.xlu0.b32.cont [9/16] 0.0, 128
    %1174 = vxpose.xlu0.b32.cont [10/16] 0.0, 128
    %1175 = vxpose.xlu0.b32.cont [11/16] 0.0, 128
    %1176 = vxpose.xlu0.b32.cont [12/16] 0.0, 128
    %1177 = vxpose.xlu0.b32.cont [13/16] 0.0, 128
    %1178 = vxpose.xlu0.b32.cont [14/16] 0.0, 128
    %1179 = vxpose.xlu0.b32.cont [15/16] 0.0, 128
    %1180 = vxpose.xlu0.b32.end [16/16] 0.0, 128
    %v1181 = vpop.trf.xlu0
    %v1182 = vpop.trf.xlu0
    %v1183 = vpop.trf.xlu0
    %v1184 = vpop.trf.xlu0
    %v1185 = vpop.trf.xlu0
    %v1186 = vpop.trf.xlu0
    %v1187 = vpop.trf.xlu0
    %v1188 = vpop.trf.xlu0
    %v1189 = vpop.trf.xlu0
    %v1190 = vpop.trf.xlu0
    %v1191 = vpop.trf.xlu0
    %v1192 = vpop.trf.xlu0
    %v1193 = vpop.trf.xlu0
    %v1194 = vpop.trf.xlu0
    %v1195 = vpop.trf.xlu0
    %v1196 = vpop.trf.xlu0
    %v1197 = vrot.slane %v1149, 4
    %v1198 = vsel %vm342, %v1197, %v1085
    %v1199 = vrot.slane %v1085, 4
    %v1200 = vsel %vm342, %v1149, %v1199
    %v1202 = vunpack.c.l.s4 1983009808
    %v1203 = vunpack.c.0.s8 %v1202
    %v1204 = vperm.slane %v1198, %v1203
    %v1206 = vunpack.c.l.s4 1983009808
    %v1207 = vunpack.c.0.s8 %v1206
    %v1208 = vperm.slane %v1200, %v1207
    %v1209 = vrot.slane %v1181, 4
    %v1210 = vsel %vm342, %v1209, %v1117
    %v1211 = vrot.slane %v1117, 4
    %v1212 = vsel %vm342, %v1181, %v1211
    %v1214 = vunpack.c.l.s4 1983009808
    %v1215 = vunpack.c.0.s8 %v1214
    %v1216 = vperm.slane %v1210, %v1215
    %v1218 = vunpack.c.l.s4 1983009808
    %v1219 = vunpack.c.0.s8 %v1218
    %v1220 = vperm.slane %v1212, %v1219
    %v1221 = vrot.slane %v1216, 4
    %v1222 = vsel %vm342, %v1221, %v1204
    %v1223 = vrot.slane %v1204, 4
    %v1224 = vsel %vm342, %v1216, %v1223
    %v1226 = vunpack.c.l.s4 1934713408
    %v1227 = vunpack.c.0.s8 %v1226
    %v1228 = vperm.slane %v1222, %v1227
    %v1230 = vunpack.c.l.s4 1934713408
    %v1231 = vunpack.c.0.s8 %v1230
    %v1232 = vperm.slane %v1224, %v1231
    %v1233 = vrot.slane %v1220, 4
    %v1234 = vsel %vm342, %v1233, %v1208
    %v1235 = vrot.slane %v1208, 4
    %v1236 = vsel %vm342, %v1220, %v1235
    %v1238 = vunpack.c.l.s4 1934713408
    %v1239 = vunpack.c.0.s8 %v1238
    %v1240 = vperm.slane %v1234, %v1239
    %v1242 = vunpack.c.l.s4 1934713408
    %v1243 = vunpack.c.0.s8 %v1242
    %v1244 = vperm.slane %v1236, %v1243
    %v1245 = vrot.slane %v1228, 4
    %v1246 = vsel %vm342, 0.0, %v1245
    %v1247 = vrot.slane %v1232, 4
    %v1248 = vsel %vm342, 0.0, %v1247
    %v1249 = vrot.slane %v1240, 4
    %v1250 = vsel %vm342, 0.0, %v1249
    %v1251 = vrot.slane %v1244, 4
    %v1252 = vsel %vm342, 0.0, %v1251
    %v1253 = vrcp.pop %v827
    %v1254 = vmul.f32 %v827, %v1253
    %v1255 = vsub.f32 1.0, %v1254
    %v1256 = vmul.f32 %v1253, %v1255
    %v1257 = vadd.f32 %v1253, %v1256
    %vm1258 = vweird.f32 %v827
    %vm1259 = vweird.f32 %v1253
    %vm1260 = vmor %vm1258, %vm1259
    %v1261 = vsel %vm1260, %v1253, %v1257
    %v1262 = vand.u32 2147483647, %v827
    %vm1263 = vcmp.eq.f32.partialorder %v1262, 8.507059e+37
    %v1264 = vand.u32 %v827, 2147483648
    %v1265 = vor.u32 1.1754944e-38, %v1264
    %v1266 = vsel %vm1263, %v1265, %v1261
    %v1267 = vmul.f32 1.0, %v1266
    %v1268 = vrcp.pop %v830
    %v1269 = vmul.f32 %v830, %v1268
    %v1270 = vsub.f32 1.0, %v1269
    %v1271 = vmul.f32 %v1268, %v1270
    %v1272 = vadd.f32 %v1268, %v1271
    %vm1273 = vweird.f32 %v830
    %vm1274 = vweird.f32 %v1268
    %vm1275 = vmor %vm1273, %vm1274
    %v1276 = vsel %vm1275, %v1268, %v1272
    %v1277 = vand.u32 2147483647, %v830
    %vm1278 = vcmp.eq.f32.partialorder %v1277, 8.507059e+37
    %v1279 = vand.u32 %v830, 2147483648
    %v1280 = vor.u32 1.1754944e-38, %v1279
    %v1281 = vsel %vm1278, %v1280, %v1276
    %v1282 = vmul.f32 1.0, %v1281
    %v1283 = vrcp.pop %v833
    %v1284 = vmul.f32 %v833, %v1283
    %v1285 = vsub.f32 1.0, %v1284
    %v1286 = vmul.f32 %v1283, %v1285
    %v1287 = vadd.f32 %v1283, %v1286
    %vm1288 = vweird.f32 %v833
    %vm1289 = vweird.f32 %v1283
    %vm1290 = vmor %vm1288, %vm1289
    %v1291 = vsel %vm1290, %v1283, %v1287
    %v1292 = vand.u32 2147483647, %v833
    %vm1293 = vcmp.eq.f32.partialorder %v1292, 8.507059e+37
    %v1294 = vand.u32 %v833, 2147483648
    %v1295 = vor.u32 1.1754944e-38, %v1294
    %v1296 = vsel %vm1293, %v1295, %v1291
    %v1297 = vmul.f32 1.0, %v1296
    %v1298 = vrcp.pop %v836
    %v1299 = vmul.f32 %v836, %v1298
    %v1300 = vsub.f32 1.0, %v1299
    %v1301 = vmul.f32 %v1298, %v1300
    %v1302 = vadd.f32 %v1298, %v1301
    %vm1303 = vweird.f32 %v836
    %vm1304 = vweird.f32 %v1298
    %vm1305 = vmor %vm1303, %vm1304
    %v1306 = vsel %vm1305, %v1298, %v1302
    %v1307 = vand.u32 2147483647, %v836
    %vm1308 = vcmp.eq.f32.partialorder %v1307, 8.507059e+37
    %v1309 = vand.u32 %v836, 2147483648
    %v1310 = vor.u32 1.1754944e-38, %v1309
    %v1311 = vsel %vm1308, %v1310, %v1306
    %v1312 = vmul.f32 1.0, %v1311
    %v1313 = vrot.slane %v1297, 4
    %v1314 = vsel %vm342, %v1313, %v1267
    %v1315 = vrot.slane %v1267, 4
    %v1316 = vsel %vm342, %v1297, %v1315
    %v1318 = vunpack.c.l.s4 1983009808
    %v1319 = vunpack.c.0.s8 %v1318
    %v1320 = vperm.slane %v1314, %v1319
    %v1322 = vunpack.c.l.s4 1983009808
    %v1323 = vunpack.c.0.s8 %v1322
    %v1324 = vperm.slane %v1316, %v1323
    %v1325 = vrot.slane %v1312, 4
    %v1326 = vsel %vm342, %v1325, %v1282
    %v1327 = vrot.slane %v1282, 4
    %v1328 = vsel %vm342, %v1312, %v1327
    %v1330 = vunpack.c.l.s4 1983009808
    %v1331 = vunpack.c.0.s8 %v1330
    %v1332 = vperm.slane %v1326, %v1331
    %v1334 = vunpack.c.l.s4 1983009808
    %v1335 = vunpack.c.0.s8 %v1334
    %v1336 = vperm.slane %v1328, %v1335
    %v1337 = vrot.slane %v1332, 4
    %v1338 = vsel %vm342, %v1337, %v1320
    %v1339 = vrot.slane %v1320, 4
    %v1340 = vsel %vm342, %v1332, %v1339
    %v1342 = vunpack.c.l.s4 1934713408
    %v1343 = vunpack.c.0.s8 %v1342
    %v1344 = vperm.slane %v1338, %v1343
    %v1346 = vunpack.c.l.s4 1934713408
    %v1347 = vunpack.c.0.s8 %v1346
    %v1348 = vperm.slane %v1340, %v1347
    %v1349 = vrot.slane %v1336, 4
    %v1350 = vsel %vm342, %v1349, %v1324
    %v1351 = vrot.slane %v1324, 4
    %v1352 = vsel %vm342, %v1336, %v1351
    %v1354 = vunpack.c.l.s4 1934713408
    %v1355 = vunpack.c.0.s8 %v1354
    %v1356 = vperm.slane %v1350, %v1355
    %v1358 = vunpack.c.l.s4 1934713408
    %v1359 = vunpack.c.0.s8 %v1358
    %v1360 = vperm.slane %v1352, %v1359
    %v1361 = vrot.slane %v1344, 4
    %v1362 = vsel %vm342, 0.0, %v1361
    %v1363 = vrot.slane %v1348, 4
    %v1364 = vsel %vm342, 0.0, %v1363
    %v1365 = vrot.slane %v1356, 4
    %v1366 = vsel %vm342, 0.0, %v1365
    %v1367 = vrot.slane %v1360, 4
    %v1368 = vsel %vm342, 0.0, %v1367
    %1370 = vset.pattern.permute.xlu0 0
    %1371 = vperm.xlu0 %1370, %v1344
    %v1372 = vpop.permute.xlu0 %1371
    %1375 = vset.pattern.permute.xlu0 0
    %1376 = vperm.xlu0 %1375, %v1362
    %v1377 = vpop.permute.xlu0 %1376
    %1380 = vset.pattern.permute.xlu0 0
    %1381 = vperm.xlu0 %1380, %v1348
    %v1382 = vpop.permute.xlu0 %1381
    %1385 = vset.pattern.permute.xlu0 0
    %1386 = vperm.xlu0 %1385, %v1364
    %v1387 = vpop.permute.xlu0 %1386
    %1390 = vset.pattern.permute.xlu0 0
    %1391 = vperm.xlu0 %1390, %v1356
    %v1392 = vpop.permute.xlu0 %1391
    %1395 = vset.pattern.permute.xlu0 0
    %1396 = vperm.xlu0 %1395, %v1366
    %v1397 = vpop.permute.xlu0 %1396
    %1400 = vset.pattern.permute.xlu0 0
    %1401 = vperm.xlu0 %1400, %v1360
    %v1402 = vpop.permute.xlu0 %1401
    %1405 = vset.pattern.permute.xlu0 0
    %1406 = vperm.xlu0 %1405, %v1368
    %v1407 = vpop.permute.xlu0 %1406
    %v1409 = vmul.f32 %v1228, %v1372
    %v1410 = vmul.f32 %v1246, %v1377
    %v1411 = vmul.f32 %v1232, %v1382
    %v1412 = vmul.f32 %v1248, %v1387
    %v1413 = vmul.f32 %v1240, %v1392
    %v1414 = vmul.f32 %v1250, %v1397
    %v1415 = vmul.f32 %v1244, %v1402
    %v1416 = vmul.f32 %v1252, %v1407
    %v1417 = vrot.slane %v1411, 4
    %v1418 = vsel %vm342, %v1417, %v1409
    %v1420 = vunpack.c.l.s4 1983009808
    %v1421 = vunpack.c.0.s8 %v1420
    %v1422 = vperm.slane %v1418, %v1421
    %v1423 = vrot.slane %v1412, 4
    %v1424 = vsel %vm342, %v1423, %v1410
    %v1426 = vunpack.c.l.s4 1983009808
    %v1427 = vunpack.c.0.s8 %v1426
    %v1428 = vperm.slane %v1424, %v1427
    %v1429 = vrot.slane %v1415, 4
    %v1430 = vsel %vm342, %v1429, %v1413
    %v1432 = vunpack.c.l.s4 1983009808
    %v1433 = vunpack.c.0.s8 %v1432
    %v1434 = vperm.slane %v1430, %v1433
    %v1435 = vrot.slane %v1416, 4
    %v1436 = vsel %vm342, %v1435, %v1414
    %v1438 = vunpack.c.l.s4 1983009808
    %v1439 = vunpack.c.0.s8 %v1438
    %v1440 = vperm.slane %v1436, %v1439
    %v1441 = vrot.slane %v1428, 4
    %v1442 = vsel %vm342, %v1441, %v1422
    %v1443 = vrot.slane %v1422, 4
    %v1444 = vsel %vm342, %v1428, %v1443
    %v1446 = vunpack.c.l.s4 1934713408
    %v1447 = vunpack.c.0.s8 %v1446
    %v1448 = vperm.slane %v1442, %v1447
    %v1450 = vunpack.c.l.s4 1934713408
    %v1451 = vunpack.c.0.s8 %v1450
    %v1452 = vperm.slane %v1444, %v1451
    %v1453 = vrot.slane %v1440, 4
    %v1454 = vsel %vm342, %v1453, %v1434
    %v1455 = vrot.slane %v1434, 4
    %v1456 = vsel %vm342, %v1440, %v1455
    %v1458 = vunpack.c.l.s4 1934713408
    %v1459 = vunpack.c.0.s8 %v1458
    %v1460 = vperm.slane %v1454, %v1459
    %v1462 = vunpack.c.l.s4 1934713408
    %v1463 = vunpack.c.0.s8 %v1462
    %v1464 = vperm.slane %v1456, %v1463
    %v1465 = vrot.slane %v1460, 4
    %v1466 = vsel %vm342, %v1465, %v1448
    %v1467 = vrot.slane %v1448, 4
    %v1468 = vsel %vm342, %v1460, %v1467
    %v1469 = vrot.slane %v1464, 4
    %v1470 = vsel %vm342, %v1469, %v1452
    %v1471 = vrot.slane %v1452, 4
    %v1472 = vsel %vm342, %v1464, %v1471
    %1474 = vrot.lane.b32.xlu0 %v1468, 8
    %v1475 = vpop.permute.xlu0 %1474
    %1478 = vrot.lane.b32.xlu0 %v1470, 16
    %v1479 = vpop.permute.xlu0 %1478
    %1482 = vrot.lane.b32.xlu0 %v1472, 24
    %v1483 = vpop.permute.xlu0 %1482
    %v1485 = vsel %vm696, %v1466, %v1475
    %vm1486 = vcmask 130048
    %v1487 = vsel %vm1486, %v1485, %v1479
    %vm1488 = vcmask 195584
    %v1489 = vsel %vm1488, %v1487, %v1483
    %v1490 = vld [vmem:[#allocation7] sm:$0xff]
    %v1491 = vld [vmem:[#allocation7 + $0x8] sm:$0xff]
    %v1492 = vld [vmem:[#allocation7 + $0x10] sm:$0xff]
    %v1493 = vld [vmem:[#allocation7 + $0x18] sm:$0xff]
    %v1494 = vld [vmem:[%s12] sm:$0x1]
    %v1496 = vperm.slane %v1494, 0
    %v1499 = vsel %vm199, %v1489, 0
    %1501 = vmatpush.msra.mxu0 0.0
    %1502 = vmatpush.msra.mxu0 0.0
    %1503 = vmatpush.msra.mxu0 0.0
    %1504 = vmatpush.msra.mxu0 0.0
    %1505 = vmatpush.msra.mxu0 0.0
    %1506 = vmatpush.msra.mxu0 0.0
    %1507 = vmatpush.msra.mxu0 0.0
    %1508 = vmatpush.msra.mxu0 0.0
    %1509 = vmatpush.msra.mxu0 0.0
    %1510 = vmatpush.msra.mxu0 0.0
    %1511 = vmatpush.msra.mxu0 0.0
    %1512 = vmatpush.msra.mxu0 0.0
    %1513 = vmatpush.msra.mxu0 %v1493
    %1514 = vmatpush.msra.mxu0 %v1492
    %1515 = vmatpush.msra.mxu0 %v1491
    %1516 = vmatpush.msra.mxu0 %v1490
    %1517 = vmatmul.f32.gmra.mxu0 %v1499
    %v1518 = vpop.f32.mrf.mxu0
    %v1519 = vadd.f32 %v1496, %v1518
    %1520 = vdwg.mxu0
    %v1521 = vld [vmem:[#allocation8] sm:$0xff]
    %v1522 = vld [vmem:[#allocation8 + $0x8] sm:$0xff]
    %v1523 = vld [vmem:[#allocation8 + $0x10] sm:$0xff]
    %v1524 = vld [vmem:[#allocation8 + $0x18] sm:$0xff]
    %v1525 = vld [vmem:[%s14] sm:$0x1]
    %v1527 = vperm.slane %v1525, 0
    %v1530 = vsel %vm199, %v1519, 0
    %1532 = vmatpush.msra.mxu0 0.0
    %1533 = vmatpush.msra.mxu0 0.0
    %1534 = vmatpush.msra.mxu0 0.0
    %1535 = vmatpush.msra.mxu0 0.0
    %1536 = vmatpush.msra.mxu0 0.0
    %1537 = vmatpush.msra.mxu0 0.0
    %1538 = vmatpush.msra.mxu0 0.0
    %1539 = vmatpush.msra.mxu0 0.0
    %1540 = vmatpush.msra.mxu0 0.0
    %1541 = vmatpush.msra.mxu0 0.0
    %1542 = vmatpush.msra.mxu0 0.0
    %1543 = vmatpush.msra.mxu0 0.0
    %1544 = vmatpush.msra.mxu0 %v1524
    %1545 = vmatpush.msra.mxu0 %v1523
    %1546 = vmatpush.msra.mxu0 %v1522
    %1547 = vmatpush.msra.mxu0 %v1521
    %1548 = vmatmul.f32.gmra.mxu0 %v1530
    %v1549 = vpop.f32.mrf.mxu0
    %v1550 = vadd.f32 %v1527, %v1549
    %1551 = vdwg.mxu0
    %1552 = vst [vmem:[#allocation10] sm:$0xff] %v1550
    // Predicated region
    $region78: #{tpu_custom_call.1} parent=1 // pred_check
      _
    $region79: #{tpu_custom_call.1} parent=1 // pred_check_branch
      %1554 = sbr.rel (0) target = $region81
    $region80: #{tpu_custom_call.1} parent=1 // pred_region
      %1556 = vsyncadd [#allocation4], 0
      %s1558 = sshll.u32 [#allocation10], 4
      %s1559 = int_to_ptr.vmem [resolvable:$true] %s1558
      %s1560 = sshll.u32 %s15, 4
      %s1561 = int_to_ptr.hbm [resolvable:$true] %s1560
      %1563 = dma.vmem_to_hbm [thread:$0]  %s1559, 128, %s1561, [#allocation4]
    $region81: #{tpu_custom_call.1} parent=1 // pred_fallthru
      _
    // Predicated region
    $region82: #{tpu_custom_call.1} parent=1 // pred_check
      _
    $region83: #{tpu_custom_call.1} parent=1 // pred_check_branch
      %1565 = sbr.rel (0) target = $region85
    $region84: #{tpu_custom_call.1} parent=1 // pred_region
      %1567 = dma.done [#allocation4], 128
    $region85: #{tpu_custom_call.1} parent=1 // pred_fallthru
      _
    %1568 = vsyncpa [#allocation3], 1
    %1569 = vsyncpa [#allocation6], 1
    %1570 = vsyncpa [#allocation9], 1
    %1571 = vsyncpa [#allocation4], 1

</llo_original>
